<compile_context>
chip_gen: v7x
topology: tpu7x:2x2x1
jax: 0.10.0
libtpu: 0.0.40
codegen_flags: <defaults>
</compile_context>

<pallas_src>
import functools

import jax
import jax.numpy as jnp
from jax.experimental import pallas as pl
from jax.experimental.pallas import tpu as pltpu

BN_EPS = 1e-5
NEG_PAD = -1e9   # logit value for padded output lanes (exp() underflows to 0 in f32)
LANE = 128


# --------------------------- hardware budget ---------------------------------

def _vmem_limit_bytes():
    """75% of physical per-core VMEM: 48 MiB on v7x (64 MiB), 96 MiB on v5e/v6e (128 MiB)."""
    phys = 64 * 1024 * 1024   # conservative default = v7x per-core VMEM
    try:
        info = pltpu.get_tpu_info()
        for attr in ("vmem_capacity_bytes", "vmem_size_bytes", "vmem_bytes"):
            v = getattr(info, attr, None)
            if v:
                phys = int(v)
                break
    except Exception:
        pass
    phys = max(64 * 1024 * 1024, min(phys, 128 * 1024 * 1024))
    return (phys * 3) // 4


_VMEM_LIMIT = _vmem_limit_bytes()


def _round_up(x, m):
    return ((x + m - 1) // m) * m


def _pick_tile(n, target):
    """Largest multiple of 128 that divides n (n is a multiple of 128) and is <= target."""
    t = min(target, n)
    t = (t // 128) * 128
    while t > 128 and n % t != 0:
        t -= 128
    return max(t, 128)


# --------------------------- fused (adj-resident) kernel ---------------------

def gcn_fused_kernel(adj_hbm, x_ref, w_ref, scale_ref, shift_ref, o_ref,
                     adj_vmem, act_ref, dma_sem):
    """All GCN layers in one call; grid axis = layer index.

    adj lives in HBM (memory_space=ANY) and is copied ONCE into the adj_vmem scratch at
    layer 0; the activation carry lives in the act_ref scratch across grid steps.
    """
    l = pl.program_id(0)
    n_layers = pl.num_programs(0)

    @pl.when(l == 0)
    def _init():
        cp = pltpu.make_async_copy(adj_hbm, adj_vmem, dma_sem)
        cp.start()
        act_ref[...] = x_ref[...]      # overlap the (only) adj DMA with the x -> act copy
        cp.wait()

    # Aggregation against the VMEM-resident adjacency (f32 accumulation on the MXU).
    agg = jnp.dot(adj_vmem[...], act_ref[...], preferred_element_type=jnp.float32)
    # Tiny per-layer feature transform + folded bias/eval-BatchNorm epilogue.
    h = jnp.dot(agg.astype(jnp.bfloat16), w_ref[0], preferred_element_type=jnp.float32)
    h = h * scale_ref[0] + shift_ref[0]

    @pl.when(l < n_layers - 1)
    def _hidden():
        act_ref[...] = jnp.maximum(h, 0.0).astype(act_ref.dtype)

    @pl.when(l == n_layers - 1)
    def _final():
        m = jnp.max(h, axis=-1, keepdims=True)
        s = h - m
        lse = jnp.log(jnp.sum(jnp.exp(s), axis=-1, keepdims=True))
        o_ref[...] = (s - lse).astype(o_ref.dtype)


def gcn_fused(adj, x, w_stack, scale_stack, shift_stack, *, vmem_limit):
    num_layers, c_pad, _ = w_stack.shape
    n_pad = adj.shape[0]

    flops = num_layers * (2 * n_pad * n_pad * c_pad + 2 * n_pad * c_pad * c_pad)
    bytes_accessed = (2 * n_pad * n_pad + 2 * n_pad * c_pad + 4 * n_pad * c_pad
                      + num_layers * (2 * c_pad * c_pad + 8 * c_pad))
    cost = pl.CostEstimate(flops=flops, transcendentals=n_pad * c_pad,
                           bytes_accessed=bytes_accessed)

    return pl.pallas_call(
        gcn_fused_kernel,
        out_shape=jax.ShapeDtypeStruct((n_pad, c_pad), jnp.float32),
        grid=(num_layers,),
        in_specs=[
            pl.BlockSpec(memory_space=pl.ANY),                     # adj stays in HBM; manual DMA once
            pl.BlockSpec((n_pad, c_pad), lambda l: (0, 0)),        # x: constant block -> fetched once
            pl.BlockSpec((1, c_pad, c_pad), lambda l: (l, 0, 0)),  # per-layer W (bf16)
            pl.BlockSpec((1, 1, c_pad), lambda l: (l, 0, 0)),      # per-layer folded scale (f32)
            pl.BlockSpec((1, 1, c_pad), lambda l: (l, 0, 0)),      # per-layer folded shift (f32)
        ],
        out_specs=pl.BlockSpec((n_pad, c_pad), lambda l: (0, 0)),  # resident; written on last layer
        scratch_shapes=[
            pltpu.VMEM((n_pad, n_pad), jnp.bfloat16),   # VMEM-resident adjacency (single copy)
            pltpu.VMEM((n_pad, c_pad), jnp.bfloat16),   # activation carry across layers
            pltpu.SemaphoreType.DMA,
        ],
        compiler_params=pltpu.CompilerParams(
            dimension_semantics=("arbitrary",),
            vmem_limit_bytes=vmem_limit),
        cost_estimate=cost,
    )(adj, x, w_stack, scale_stack, shift_stack)


# --------------------------- streaming (large-N) kernel ----------------------

def gcn_layer_stream_kernel(adj_ref, feat_ref, w_ref, scale_ref, shift_ref, o_ref,
                            acc_ref, *, activation, tk):
    """One GCN layer, adj streamed in (tm, tk) tiles; features are VMEM-resident."""
    k = pl.program_id(1)

    @pl.when(k == 0)
    def _init():
        acc_ref[...] = jnp.zeros_like(acc_ref)

    start = pl.multiple_of(k * tk, tk)
    acc_ref[...] += jnp.dot(adj_ref[...], feat_ref[pl.ds(start, tk), :],
                            preferred_element_type=jnp.float32)

    @pl.when(k == pl.num_programs(1) - 1)
    def _finalize():
        h = jnp.dot(acc_ref[...].astype(jnp.bfloat16), w_ref[...],
                    preferred_element_type=jnp.float32)
        h = h * scale_ref[...] + shift_ref[...]
        if activation == "relu":
            o_ref[...] = jnp.maximum(h, 0.0).astype(o_ref.dtype)
        else:  # log_softmax over the lane-dense, padded channel axis
            m = jnp.max(h, axis=-1, keepdims=True)
            s = h - m
            lse = jnp.log(jnp.sum(jnp.exp(s), axis=-1, keepdims=True))
            o_ref[...] = (s - lse).astype(o_ref.dtype)


def gcn_layer_stream(adj, feat, w, scale, shift, *, activation, out_dtype,
                     vmem_limit, tm_target, tk_target):
    n = adj.shape[0]
    c_pad = w.shape[1]
    # Cap tm at N/2 so the "parallel" row axis has >= 2 tiles (keeps both v7x TCs busy).
    tm = _pick_tile(n, min(tm_target, max(n // 2, 128)))
    tk = _pick_tile(n, tk_target)
    grid = (n // tm, n // tk)

    flops = 2 * n * n * c_pad + 2 * n * c_pad * c_pad
    bytes_accessed = (2 * n * n + 2 * n * c_pad + 2 * c_pad * c_pad + 8 * c_pad
                      + n * c_pad * jnp.dtype(out_dtype).itemsize)
    cost = pl.CostEstimate(
        flops=flops,
        transcendentals=(n * c_pad if activation == "log_softmax" else 0),
        bytes_accessed=bytes_accessed)

    kernel = functools.partial(gcn_layer_stream_kernel, activation=activation, tk=tk)
    return pl.pallas_call(
        kernel,
        out_shape=jax.ShapeDtypeStruct((n, c_pad), out_dtype),
        grid=grid,
        in_specs=[
            # adj tile: the only O(N^2) stream.  (Optional extra: pipeline_mode=pl.Buffered(3))
            pl.BlockSpec((tm, tk), lambda r, k: (r, k)),
            # features: full-array block, constant index -> fetched once per call, VMEM-resident.
            pl.BlockSpec((n, c_pad), lambda r, k: (0, 0)),
            pl.BlockSpec((c_pad, c_pad), lambda r, k: (0, 0)),   # W (bf16)
            pl.BlockSpec((1, c_pad), lambda r, k: (0, 0)),       # folded BN scale (f32)
            pl.BlockSpec((1, c_pad), lambda r, k: (0, 0)),       # folded BN shift (f32)
        ],
        out_specs=pl.BlockSpec((tm, c_pad), lambda r, k: (r, 0)),
        scratch_shapes=[pltpu.VMEM((tm, c_pad), jnp.float32)],
        compiler_params=pltpu.CompilerParams(
            dimension_semantics=("parallel", "arbitrary"),
            vmem_limit_bytes=vmem_limit),
        cost_estimate=cost,
    )(adj, feat, w, scale, shift)


# ------------------------------- wrappers -------------------------------------

def gcn_norm_dense(adj):
    """Glue: symmetric GCN normalization D^{-1/2} (A + I) D^{-1/2} (plain JAX)."""
    n = adj.shape[0]
    a_hat = adj + jnp.eye(n, dtype=adj.dtype)
    deg = jnp.sum(a_hat, axis=1)
    d_inv_sqrt = jnp.where(deg > 0, 1.0 / jnp.sqrt(deg), 0.0)
    return a_hat * d_inv_sqrt[:, None] * d_inv_sqrt[None, :]


def _fold_and_pad_params(params, c_pad):
    """Fold bias + eval-mode BN into (scale, shift); pad all layers to c_pad lanes."""
    hidden_params, (w_last, b_last) = params
    ws, scales, shifts = [], [], []
    for (w, b, gamma, beta, mean, var) in hidden_params:
        scale = gamma * jax.lax.rsqrt(var + BN_EPS)       # (1, c_out)
        shift = beta + scale * (b - mean)                 # BN(h + b) = h*scale + shift
        ci, co = w.shape
        ws.append(jnp.pad(w, ((0, c_pad - ci), (0, c_pad - co))).astype(jnp.bfloat16))
        scales.append(jnp.pad(scale, ((0, 0), (0, c_pad - co))))   # padded channels -> 0
        shifts.append(jnp.pad(shift, ((0, 0), (0, c_pad - co))))   # -> relu(0) = 0
    ci, co = w_last.shape
    ws.append(jnp.pad(w_last, ((0, c_pad - ci), (0, c_pad - co))).astype(jnp.bfloat16))
    scales.append(jnp.ones((1, c_pad), jnp.float32))
    shifts.append(jnp.pad(b_last, ((0, 0), (0, c_pad - co)), constant_values=NEG_PAD))
    return ws, scales, shifts


@functools.partial(jax.jit,
                   static_argnames=("force_streaming", "tm_target", "tk_target"))
def gcn_forward(x, adj_norm, params, *, force_streaming=False,
                tm_target=512, tk_target=2048):
    hidden_params, (w_last, b_last) = params
    n, in_c = x.shape
    out_c = w_last.shape[1]
    c_dims = [in_c] + [hp[0].shape[1] for hp in hidden_params] + [out_c]
    c_pad = _round_up(max(c_dims), LANE)     # 128-lane channels end-to-end
    n_pad = _round_up(n, LANE)               # pad N so tiles always divide evenly

    ws, scales, shifts = _fold_and_pad_params(params, c_pad)
    num_layers = len(ws)

    adj = jnp.pad(adj_norm, ((0, n_pad - n), (0, n_pad - n))).astype(jnp.bfloat16)
    feat = jnp.pad(x, ((0, n_pad - n), (0, c_pad - in_c))).astype(jnp.bfloat16)

    vmem_limit = _VMEM_LIMIT

    # Per-core VMEM needed by the adj-resident fused path (generous estimate: single adj
    # copy via manual DMA, double-buffered small operands, f32 intermediates, 2 MiB slack).
    fused_vmem = (2 * n_pad * n_pad                   # adjacency bf16 (single copy)
                  + 2 * n_pad * c_pad                 # activation-carry scratch (bf16)
                  + 2 * 2 * n_pad * c_pad             # x (bf16, double-buffered)
                  + 2 * 4 * n_pad * c_pad             # output (f32, double-buffered)
                  + 2 * 4 * n_pad * c_pad             # f32 agg/h intermediates
                  + 6 * (2 * c_pad * c_pad + 8 * c_pad)
                  + (2 << 20))
    use_fused = (not force_streaming) and fused_vmem <= vmem_limit

    if use_fused:
        w_stack = jnp.stack(ws)             # [L, c_pad, c_pad] bf16
        scale_stack = jnp.stack(scales)     # [L, 1, c_pad] f32
        shift_stack = jnp.stack(shifts)     # [L, 1, c_pad] f32
        out = gcn_fused(adj, feat, w_stack, scale_stack, shift_stack,
                        vmem_limit=vmem_limit)
    else:
        for i in range(num_layers):
            is_last = i == num_layers - 1
            feat = gcn_layer_stream(
                adj, feat, ws[i], scales[i], shifts[i],
                activation="log_softmax" if is_last else "relu",
                out_dtype=jnp.float32 if is_last else jnp.bfloat16,
                vmem_limit=vmem_limit, tm_target=tm_target, tk_target=tk_target)
        out = feat

    return out[:n, :out_c]


def gcn_reference(x, adj, params):
    """Pure-JAX f32 reference (eval-mode forward) for correctness checking."""
    hidden_params, (w_last, b_last) = params
    h = x
    for (w, b, gamma, beta, mean, var) in hidden_params:
        h = adj @ (h @ w) + b
        h = gamma * (h - mean) * jax.lax.rsqrt(var + BN_EPS) + beta
        h = jnp.maximum(h, 0.0)
    h = adj @ (h @ w_last) + b_last
    return jax.nn.log_softmax(h, axis=-1)


# --------------------------------- main ---------------------------------------

if __name__ == "__main__":
    # Small, module-consistent shapes.
    N = 256            # number of graph nodes
    IN_C = 32          # in_channels
    HID_C = 64         # hidden_channels
    OUT_C = 16         # out_channels
    NUM_LAYERS = 3     # -> 2 hidden GCNConv+BN+ReLU blocks, 1 final GCNConv
    # dropout p = 0.5 is a no-op in eval mode.

    key = jax.random.PRNGKey(0)
    keys = jax.random.split(key, 16)

    # Node features.
    x = jax.random.normal(keys[0], (N, IN_C), dtype=jnp.float32)

    # Random symmetric adjacency, then GCN normalization (glue, plain JAX).
    a = (jax.random.uniform(keys[1], (N, N)) < 0.05).astype(jnp.float32)
    a = jnp.maximum(a, a.T)
    adj_norm = gcn_norm_dense(a)

    # Deterministic parameter init (glorot-ish weights, non-trivial BN params).
    def glorot(k, shape):
        fan_in, fan_out = shape
        s = jnp.sqrt(6.0 / (fan_in + fan_out))
        return jax.random.uniform(k, shape, jnp.float32, -s, s)

    dims = [IN_C] + [HID_C] * (NUM_LAYERS - 1) + [OUT_C]
    hidden_params = []
    ki = 2
    for layer in range(NUM_LAYERS - 1):
        c_in, c_out = dims[layer], dims[layer + 1]
        w = glorot(keys[ki], (c_in, c_out)); ki += 1
        b = 0.01 * jax.random.normal(keys[ki], (1, c_out), jnp.float32); ki += 1
        gamma = 1.0 + 0.1 * jax.random.normal(keys[ki], (1, c_out), jnp.float32); ki += 1
        beta = 0.1 * jax.random.normal(keys[ki], (1, c_out), jnp.float32); ki += 1
        mean = 0.1 * jax.random.normal(keys[ki], (1, c_out), jnp.float32); ki += 1
        var = 1.0 + 0.1 * jax.random.uniform(keys[ki], (1, c_out), jnp.float32); ki += 1
        hidden_params.append((w, b, gamma, beta, mean, var))
    w_last = glorot(keys[ki], (dims[-2], dims[-1])); ki += 1
    b_last = 0.01 * jax.random.normal(keys[ki], (1, dims[-1]), jnp.float32)

    params = (tuple(hidden_params), (w_last, b_last))

    ref = gcn_reference(x, adj_norm, params)

    # 1) Default path: adj-resident fused kernel (N=256 trivially fits VMEM).
    out_fused = jax.block_until_ready(gcn_forward(x, adj_norm, params))
    # 2) Forced streaming path with small tile targets to exercise the (2, 2) tiled /
    #    accumulating grid and the resident-feature dynamic slicing.
    out_stream = jax.block_until_ready(
        gcn_forward(x, adj_norm, params, force_streaming=True,
                    tm_target=128, tk_target=128))

    for name, out in (("fused", out_fused), ("stream", out_stream)):
        assert out.shape == (N, OUT_C), (name, out.shape)
        # log_softmax rows should exponentiate-and-sum to ~1
        row_sums = jnp.sum(jnp.exp(out), axis=-1)
        assert jnp.allclose(row_sums, 1.0, atol=1e-4), name
        # bf16 kernel vs f32 reference (loose tolerance for the bf16 MXU path)
        max_err = float(jnp.max(jnp.abs(out - ref)))
        assert max_err < 1e-1, f"{name} kernel deviates from f32 reference: {max_err}"

    print("KERNEL_OK")
</pallas_src>

<mosaic_0001>
module attributes {stable_mosaic.version = 11 : i64} {
  func.func @gcn_fused_kernel(%arg0: i32, %arg1: memref<256x256xbf16, #tpu.memory_space<any>>, %arg2: memref<256x128xbf16, #tpu.memory_space<vmem>>, %arg3: memref<1x128x128xbf16, #tpu.memory_space<vmem>>, %arg4: memref<1x1x128xf32, #tpu.memory_space<vmem>>, %arg5: memref<1x1x128xf32, #tpu.memory_space<vmem>>, %arg6: memref<256x128xf32, #tpu.memory_space<vmem>>, %arg7: memref<256x256xbf16, #tpu.memory_space<vmem>>, %arg8: memref<256x128xbf16, #tpu.memory_space<vmem>>, %arg9: memref<!tpu.dma_semaphore, #tpu.memory_space<semaphore_mem>>) attributes {dimension_semantics = [#tpu.dimension_semantics<arbitrary>], iteration_bounds = array<i64: 3>, scalar_prefetch = 0 : i64, scratch_operands = 3 : i64, tpu.core_type = #tpu.core_type<tc>, window_params = [{}, {pipeline_mode = #tpu.pipeline_mode<synchronous>, transform_indices = @transform_1, window_bounds = array<i64: 256, 128>}, {transform_indices = @transform_2, window_bounds = array<i64: 1, 128, 128>}, {transform_indices = @transform_3, window_bounds = array<i64: 1, 1, 128>}, {transform_indices = @transform_4, window_bounds = array<i64: 1, 1, 128>}, {pipeline_mode = #tpu.pipeline_mode<synchronous>, transform_indices = @transform_5, window_bounds = array<i64: 256, 128>}]} {
    %c0_i32 = arith.constant 0 : i32
    %0 = arith.cmpi eq, %arg0, %c0_i32 : i32
    %1 = arith.extui %0 : i1 to i32
    %c0_i32_0 = arith.constant 0 : i32
    %2 = arith.cmpi ne, %1, %c0_i32_0 : i32
    scf.if %2 {
      tpu.enqueue_dma source(%arg1 : memref<256x256xbf16, #tpu.memory_space<any>>) target(%arg7 : memref<256x256xbf16, #tpu.memory_space<vmem>>) target_semaphore(%arg9 : memref<!tpu.dma_semaphore, #tpu.memory_space<semaphore_mem>>)
      %c0_17 = arith.constant 0 : index
      %c0_18 = arith.constant 0 : index
      %24 = vector.load %arg2[%c0_17, %c0_18] : memref<256x128xbf16, #tpu.memory_space<vmem>>, vector<256x128xbf16>
      %c0_19 = arith.constant 0 : index
      %c0_20 = arith.constant 0 : index
      %25 = vector.load %arg8[%c0_19, %c0_20] : memref<256x128xbf16, #tpu.memory_space<vmem>>, vector<256x128xbf16>
      tpu.vector_store %arg8[%c0_19, %c0_20], %24 {strides = array<i32>} : memref<256x128xbf16, #tpu.memory_space<vmem>>, vector<256x128xbf16>,
      tpu.wait_dma2 semaphore(%arg9 : memref<!tpu.dma_semaphore, #tpu.memory_space<semaphore_mem>>) src(%arg1 : memref<256x256xbf16, #tpu.memory_space<any>>) dst(%arg7 : memref<256x256xbf16, #tpu.memory_space<vmem>>)
    } else {
    }
    %c0 = arith.constant 0 : index
    %c0_1 = arith.constant 0 : index
    %3 = vector.load %arg7[%c0, %c0_1] : memref<256x256xbf16, #tpu.memory_space<vmem>>, vector<256x256xbf16>
    %c0_2 = arith.constant 0 : index
    %c0_3 = arith.constant 0 : index
    %4 = vector.load %arg8[%c0_2, %c0_3] : memref<256x128xbf16, #tpu.memory_space<vmem>>, vector<256x128xbf16>
    %cst = arith.constant dense<0.000000e+00> : vector<256x128xf32>
    %5 = tpu.matmul %3, %4, %cst {dimension_numbers = #tpu.dot_dimension_numbers<[1], [0], [0], [1], [0, 0, 1, 1], [], []>} : vector<256x256xbf16>, vector<256x128xbf16>, vector<256x128xf32> -> vector<256x128xf32>
    %6 = arith.truncf %5 : vector<256x128xf32> to vector<256x128xbf16>
    %c0_4 = arith.constant 0 : index
    %c0_5 = arith.constant 0 : index
    %c0_6 = arith.constant 0 : index
    %7 = vector.load %arg3[%c0_4, %c0_5, %c0_6] : memref<1x128x128xbf16, #tpu.memory_space<vmem>>, vector<1x128x128xbf16>
    %8 = vector.shape_cast %7 : vector<1x128x128xbf16> to vector<128x128xbf16>
    %cst_7 = arith.constant dense<0.000000e+00> : vector<256x128xf32>
    %9 = tpu.matmul %6, %8, %cst_7 {dimension_numbers = #tpu.dot_dimension_numbers<[1], [0], [0], [1], [0, 0, 1, 1], [], []>} : vector<256x128xbf16>, vector<128x128xbf16>, vector<256x128xf32> -> vector<256x128xf32>
    %c0_8 = arith.constant 0 : index
    %c0_9 = arith.constant 0 : index
    %c0_10 = arith.constant 0 : index
    %10 = vector.load %arg4[%c0_8, %c0_9, %c0_10] : memref<1x1x128xf32, #tpu.memory_space<vmem>>, vector<1x1x128xf32>
    %11 = vector.shape_cast %10 : vector<1x1x128xf32> to vector<1x128xf32>
    %12 = vector.broadcast %11 : vector<1x128xf32> to vector<256x128xf32>
    %13 = arith.mulf %9, %12 : vector<256x128xf32>
    %c0_11 = arith.constant 0 : index
    %c0_12 = arith.constant 0 : index
    %c0_13 = arith.constant 0 : index
    %14 = vector.load %arg5[%c0_11, %c0_12, %c0_13] : memref<1x1x128xf32, #tpu.memory_space<vmem>>, vector<1x1x128xf32>
    %15 = vector.shape_cast %14 : vector<1x1x128xf32> to vector<1x128xf32>
    %16 = vector.broadcast %15 : vector<1x128xf32> to vector<256x128xf32>
    %17 = arith.addf %13, %16 : vector<256x128xf32>
    %c2_i32 = arith.constant 2 : i32
    %18 = arith.cmpi slt, %arg0, %c2_i32 : i32
    %19 = arith.extui %18 : i1 to i32
    %c0_i32_14 = arith.constant 0 : i32
    %20 = arith.cmpi ne, %19, %c0_i32_14 : i32
    scf.if %20 {
      %cst_17 = arith.constant 0.000000e+00 : f32
      %24 = vector.broadcast %cst_17 : f32 to vector<256x128xf32>
      %25 = arith.maximumf %17, %24 : vector<256x128xf32>
      %26 = arith.truncf %25 : vector<256x128xf32> to vector<256x128xbf16>
      %c0_18 = arith.constant 0 : index
      %c0_19 = arith.constant 0 : index
      %27 = vector.load %arg8[%c0_18, %c0_19] : memref<256x128xbf16, #tpu.memory_space<vmem>>, vector<256x128xbf16>
      tpu.vector_store %arg8[%c0_18, %c0_19], %26 {strides = array<i32>} : memref<256x128xbf16, #tpu.memory_space<vmem>>, vector<256x128xbf16>,
    } else {
    }
    %c2_i32_15 = arith.constant 2 : i32
    %21 = arith.cmpi eq, %arg0, %c2_i32_15 : i32
    %22 = arith.extui %21 : i1 to i32
    %c0_i32_16 = arith.constant 0 : i32
    %23 = arith.cmpi ne, %22, %c0_i32_16 : i32
    scf.if %23 {
      %cst_17 = arith.constant dense<0xFF800000> : vector<256xf32>
      %24 = vector.multi_reduction <maximumf>, %17, %cst_17 [1] : vector<256x128xf32> to vector<256xf32>
      %25 = vector.shape_cast %24 : vector<256xf32> to vector<256x1xf32>
      %26 = vector.broadcast %25 : vector<256x1xf32> to vector<256x128xf32>
      %27 = arith.subf %17, %26 : vector<256x128xf32>
      %28 = math.exp %27 : vector<256x128xf32>
      %cst_18 = arith.constant dense<0.000000e+00> : vector<256xf32>
      %29 = vector.multi_reduction <add>, %28, %cst_18 [1] : vector<256x128xf32> to vector<256xf32>
      %30 = vector.shape_cast %29 : vector<256xf32> to vector<256x1xf32>
      %31 = math.log %30 : vector<256x1xf32>
      %32 = vector.broadcast %31 : vector<256x1xf32> to vector<256x128xf32>
      %33 = arith.subf %27, %32 : vector<256x128xf32>
      %c0_19 = arith.constant 0 : index
      %c0_20 = arith.constant 0 : index
      %34 = vector.load %arg6[%c0_19, %c0_20] : memref<256x128xf32, #tpu.memory_space<vmem>>, vector<256x128xf32>
      tpu.vector_store %arg6[%c0_19, %c0_20], %33 {strides = array<i32>} : memref<256x128xf32, #tpu.memory_space<vmem>>, vector<256x128xf32>,
    } else {
    }
    return
  }
  func.func @transform_1(%arg0: i32) -> (i32, i32) {
    %c0_i32 = arith.constant 0 : i32
    %c0_i32_0 = arith.constant 0 : i32
    %c0_i32_1 = arith.constant 0 : i32
    return %c0_i32, %c0_i32_0 : i32, i32
  }
  func.func @transform_2(%arg0: i32) -> (i32, i32, i32) {
    %c0_i32 = arith.constant 0 : i32
    %c0_i32_0 = arith.constant 0 : i32
    %c0_i32_1 = arith.constant 0 : i32
    return %arg0, %c0_i32, %c0_i32_0 : i32, i32, i32
  }
  func.func @transform_3(%arg0: i32) -> (i32, i32, i32) {
    %c0_i32 = arith.constant 0 : i32
    %c0_i32_0 = arith.constant 0 : i32
    %c0_i32_1 = arith.constant 0 : i32
    return %arg0, %c0_i32, %c0_i32_0 : i32, i32, i32
  }
  func.func @transform_4(%arg0: i32) -> (i32, i32, i32) {
    %c0_i32 = arith.constant 0 : i32
    %c0_i32_0 = arith.constant 0 : i32
    %c0_i32_1 = arith.constant 0 : i32
    return %arg0, %c0_i32, %c0_i32_0 : i32, i32, i32
  }
  func.func @transform_5(%arg0: i32) -> (i32, i32) {
    %c0_i32 = arith.constant 0 : i32
    %c0_i32_0 = arith.constant 0 : i32
    %c0_i32_1 = arith.constant 0 : i32
    return %c0_i32, %c0_i32_0 : i32, i32
  }
}

</mosaic_0001>

<llo_original>
// kernel: gcn_forward.1
$region0: #{gcn_forward.1}
  #allocation0 [shape = 'u32[]', space=smem, size = 0x4, offset = 0x4, fixed_abs, tag = 'smem constant byte address 0x4 - core index']
  #allocation1 [shape = 'u32[144,128]{1,0:T(1,128)}', space=vmem, size = 0x12000, scoped, tag = 'internal scratch']
  #allocation2 [shape = 'bf16[256,256]{1,0:T(16,128)(2,1)}', space=vmem, size = 0x20000, scoped, tag = 'scratch operand']
  #allocation3 [shape = 'bf16[256,128]{1,0:T(16,128)(2,1)}', space=vmem, size = 0x10000, scoped, tag = 'scratch operand']
  #allocation4 [shape = 's32[1]{0}', space=sflag, size = 0x4, scoped, tag = 'scratch operand']
  #allocation5 [shape = 's32[]', space=sflag, size = 0x4, offset = 0, fixed_abs, tag = 'sflag constant byte address 0x0 - dummy sync flag']
  %s0 = inlined_call_operand.vmem [shape: bf16[256,256], index: 0, kind: input, shape index: {}]
  %s1 = inlined_call_operand.vmem [shape: bf16[256,128], index: 1, kind: input, shape index: {}]
  %s2 = inlined_call_operand.vmem [shape: bf16[3,128,128], index: 2, kind: input, shape index: {}]
  %s3 = inlined_call_operand.vmem [shape: f32[3,1,128], index: 3, kind: input, shape index: {}]
  %s4 = inlined_call_operand.vmem [shape: f32[3,1,128], index: 4, kind: input, shape index: {}]
  %s5 = inlined_call_operand.vmem [shape: f32[256,128], index: 5, kind: output, shape index: {}]
  %s6 = sld [smem:[#allocation0]]
  $region98: #{gcn_forward.1} parent=0
    _
  %s8 = ssub.s32 1, %s6
  %s9 = scalar_select 0, %s8, %s6
  loop: start=0, step=1, limit=5
  $region2: #{gcn_forward.1} parent=0 // loop_pre_header
    _
  $region3: #{gcn_forward.1} parent=0 // loop_header
    %s11 = sphi 0, %s15
    %p12 = scmp.ge.s32.totalorder %s11, 5
    %s19 = sphi 0, %s19
    %s21 = sphi 0, %s19
    %s22 = sphi 0, %s21
    %s36 = sphi 0, %s22
    %s42 = sphi 0, %s44
    %s45 = sphi 0, %s42
    %s46 = sphi 0, %s45
    %s62 = sphi 0, %s46
    %s68 = sphi 0, %s70
    %s71 = sphi 0, %s68
    %s72 = sphi 0, %s71
    %s88 = sphi 0, %s72
    %s94 = sphi 0, %s96
    %s97 = sphi 0, %s94
    %s98 = sphi 0, %s97
    %s114 = sphi 0, %s98
    %s118 = sphi 0, %s118
    %s120 = sphi 0, %s118
    %s121 = sphi 0, %s120
    %s135 = sphi 0, %s121
  $region4: #{gcn_forward.1} parent=0 // loop_header_branch
    %14 = sbr.rel (%p12) target = $region8
  $region5: #{gcn_forward.1} parent=0 // loop_body
    %s16 = ssub.s32 %s11, 1
    %s17 = ssub.s32 %s11, 2
    %s18 = sadd.s32 %s11, 1
    %s20 = sadd.s32 %s19, 1
    %p23 = scmp.eq.s32.totalorder %s11, 2
    %p24 = scmp.ne.s32.totalorder %s19, %s21
    %p25 = scmp.eq.s32.totalorder %s11, 0
    %p26 = por %p24, %p25
    %p27 = scmp.ne.s32.totalorder %s19, %s21
    %p28 = scmp.eq.s32.totalorder %s16, 2
    %p29 = por %p27, %p28
    %p30 = scmp.ne.s32.totalorder %s21, %s22
    %p31 = scmp.eq.s32.totalorder %s16, 0
    %p32 = por %p30, %p31
    %p33 = scmp.ne.s32.totalorder %s21, %s22
    %p34 = scmp.eq.s32.totalorder %s17, 2
    %p35 = por %p33, %p34
    %p37 = scmp.ne.s32.totalorder %s22, %s36
    %p38 = scmp.eq.s32.totalorder %s17, 0
    %p39 = por %p37, %p38
    %s40 = ssub.s32 %s11, %s18
    %p41 = scmp.eq.s32.totalorder %s40, 0
    %s43 = sadd.s32 %s42, 1
    %s44 = scalar_select %p41, %s42, %s43
    %p47 = pneg %p41
    %p48 = scmp.eq.s32.totalorder %s11, 2
    %p49 = por %p47, %p48
    %p50 = scmp.ne.s32.totalorder %s42, %s45
    %p51 = scmp.eq.s32.totalorder %s11, 0
    %p52 = por %p50, %p51
    %p53 = scmp.ne.s32.totalorder %s42, %s45
    %p54 = scmp.eq.s32.totalorder %s16, 2
    %p55 = por %p53, %p54
    %p56 = scmp.ne.s32.totalorder %s45, %s46
    %p57 = scmp.eq.s32.totalorder %s16, 0
    %p58 = por %p56, %p57
    %p59 = scmp.ne.s32.totalorder %s45, %s46
    %p60 = scmp.eq.s32.totalorder %s17, 2
    %p61 = por %p59, %p60
    %p63 = scmp.ne.s32.totalorder %s46, %s62
    %p64 = scmp.eq.s32.totalorder %s17, 0
    %p65 = por %p63, %p64
    %s66 = ssub.s32 %s11, %s18
    %p67 = scmp.eq.s32.totalorder %s66, 0
    %s69 = sadd.s32 %s68, 1
    %s70 = scalar_select %p67, %s68, %s69
    %p73 = pneg %p67
    %p74 = scmp.eq.s32.totalorder %s11, 2
    %p75 = por %p73, %p74
    %p76 = scmp.ne.s32.totalorder %s68, %s71
    %p77 = scmp.eq.s32.totalorder %s11, 0
    %p78 = por %p76, %p77
    %p79 = scmp.ne.s32.totalorder %s68, %s71
    %p80 = scmp.eq.s32.totalorder %s16, 2
    %p81 = por %p79, %p80
    %p82 = scmp.ne.s32.totalorder %s71, %s72
    %p83 = scmp.eq.s32.totalorder %s16, 0
    %p84 = por %p82, %p83
    %p85 = scmp.ne.s32.totalorder %s71, %s72
    %p86 = scmp.eq.s32.totalorder %s17, 2
    %p87 = por %p85, %p86
    %p89 = scmp.ne.s32.totalorder %s72, %s88
    %p90 = scmp.eq.s32.totalorder %s17, 0
    %p91 = por %p89, %p90
    %s92 = ssub.s32 %s11, %s18
    %p93 = scmp.eq.s32.totalorder %s92, 0
    %s95 = sadd.s32 %s94, 1
    %s96 = scalar_select %p93, %s94, %s95
    %p99 = pneg %p93
    %p100 = scmp.eq.s32.totalorder %s11, 2
    %p101 = por %p99, %p100
    %p102 = scmp.ne.s32.totalorder %s94, %s97
    %p103 = scmp.eq.s32.totalorder %s11, 0
    %p104 = por %p102, %p103
    %p105 = scmp.ne.s32.totalorder %s94, %s97
    %p106 = scmp.eq.s32.totalorder %s16, 2
    %p107 = por %p105, %p106
    %p108 = scmp.ne.s32.totalorder %s97, %s98
    %p109 = scmp.eq.s32.totalorder %s16, 0
    %p110 = por %p108, %p109
    %p111 = scmp.ne.s32.totalorder %s97, %s98
    %p112 = scmp.eq.s32.totalorder %s17, 2
    %p113 = por %p111, %p112
    %p115 = scmp.ne.s32.totalorder %s98, %s114
    %p116 = scmp.eq.s32.totalorder %s17, 0
    %p117 = por %p115, %p116
    %s119 = sadd.s32 %s118, 1
    %p122 = scmp.eq.s32.totalorder %s11, 2
    %p123 = scmp.ne.s32.totalorder %s118, %s120
    %p124 = scmp.eq.s32.totalorder %s11, 0
    %p125 = por %p123, %p124
    %p126 = scmp.ne.s32.totalorder %s118, %s120
    %p127 = scmp.eq.s32.totalorder %s16, 2
    %p128 = por %p126, %p127
    %p129 = scmp.ne.s32.totalorder %s120, %s121
    %p130 = scmp.eq.s32.totalorder %s16, 0
    %p131 = por %p129, %p130
    %p132 = scmp.ne.s32.totalorder %s120, %s121
    %p133 = scmp.eq.s32.totalorder %s17, 2
    %p134 = por %p132, %p133
    %p136 = scmp.ne.s32.totalorder %s121, %s135
    %p137 = scmp.eq.s32.totalorder %s17, 0
    %p138 = por %p136, %p137
    %p139 = scmp.le.s32.totalorder 1, %s11
    %p140 = scmp.lt.s32.totalorder %s11, 4
    %p141 = pnand %p139, %p140
    %p142 = pneg %p141
    // Predicated region
    $region9: #{gcn_forward.1} parent=5 // pred_check
      _
    $region10: #{gcn_forward.1} parent=5 // pred_check_branch
      %144 = sbr.rel (%p141) target = $region12
    $region11: #{gcn_forward.1} parent=5 // pred_region
      %s145 = ssub.s32 %s11, 1
      // Predicated region
      $region13: #{gcn_forward.1} parent=11 // pred_check
        %p146 = pneg %p32
      $region14: #{gcn_forward.1} parent=11 // pred_check_branch
        %148 = sbr.rel (%p146) target = $region16
      $region15: #{gcn_forward.1} parent=11 // pred_region
        _
      $region16: #{gcn_forward.1} parent=11 // pred_fallthru
        _
    $region12: #{gcn_forward.1} parent=5 // pred_fallthru
      _
    %p149 = scmp.lt.s32.totalorder %s11, 3
    // Predicated region
    $region17: #{gcn_forward.1} parent=5 // pred_check
      %p150 = pneg %p149
    $region18: #{gcn_forward.1} parent=5 // pred_check_branch
      %152 = sbr.rel (%p150) target = $region20
    $region19: #{gcn_forward.1} parent=5 // pred_region
      // Predicated region
      $region21: #{gcn_forward.1} parent=19 // pred_check
        %p153 = pneg %p52
      $region22: #{gcn_forward.1} parent=19 // pred_check_branch
        %155 = sbr.rel (%p153) target = $region24
      $region23: #{gcn_forward.1} parent=19 // pred_region
        %p156 = scmp.lt.s32.totalorder %s11, 2
        %s157 = scalar_select %p156, %s11, 2
        %s158 = smul.addr %s157, 16
        %s159 = smul.addr %s158, 4
        %s160 = scalar_lea.vmem %s2, %s159
      $region24: #{gcn_forward.1} parent=19 // pred_fallthru
        _
      // Predicated region
      $region25: #{gcn_forward.1} parent=19 // pred_check
        %p161 = pneg %p78
      $region26: #{gcn_forward.1} parent=19 // pred_check_branch
        %163 = sbr.rel (%p161) target = $region28
      $region27: #{gcn_forward.1} parent=19 // pred_region
        %p164 = scmp.lt.s32.totalorder %s11, 2
        %s165 = scalar_select %p164, %s11, 2
        %s166 = scalar_lea.vmem %s3, %s165
      $region28: #{gcn_forward.1} parent=19 // pred_fallthru
        _
      // Predicated region
      $region29: #{gcn_forward.1} parent=19 // pred_check
        %p167 = pneg %p104
      $region30: #{gcn_forward.1} parent=19 // pred_check_branch
        %169 = sbr.rel (%p167) target = $region32
      $region31: #{gcn_forward.1} parent=19 // pred_region
        %p170 = scmp.lt.s32.totalorder %s11, 2
        %s171 = scalar_select %p170, %s11, 2
        %s172 = scalar_lea.vmem %s4, %s171
      $region32: #{gcn_forward.1} parent=19 // pred_fallthru
        _
    $region20: #{gcn_forward.1} parent=5 // pred_fallthru
      _
    %p173 = scmp.le.s32.totalorder 1, %s11
    %p174 = scmp.lt.s32.totalorder %s11, 4
    %p175 = pnand %p173, %p174
    %p176 = pneg %p175
    // Predicated region
    $region33: #{gcn_forward.1} parent=5 // pred_check
      _
    $region34: #{gcn_forward.1} parent=5 // pred_check_branch
      %178 = sbr.rel (%p175) target = $region36
    $region35: #{gcn_forward.1} parent=5 // pred_region
      %s179 = ssub.s32 %s11, 1
      %p180 = pneg %p32
      %p181 = pneg %p29
      %p182 = scmp.lt.s32.totalorder %s16, 2
      %s183 = scalar_select %p182, %s16, 2
      %s184 = smul.addr %s183, 16
      %s185 = smul.addr %s184, 4
      %s186 = scalar_lea.vmem %s2, %s185
      %p187 = pneg %p58
      %p188 = pneg %p55
      %p189 = scmp.lt.s32.totalorder %s16, 2
      %s190 = scalar_select %p189, %s16, 2
      %s191 = scalar_lea.vmem %s3, %s190
      %p192 = pneg %p84
      %p193 = pneg %p81
      %p194 = scmp.lt.s32.totalorder %s16, 2
      %s195 = scalar_select %p194, %s16, 2
      %s196 = scalar_lea.vmem %s4, %s195
      %p197 = pneg %p110
      %p198 = pneg %p107
      %p199 = pneg %p131
      %p200 = pneg %p128
      %p201 = scmp.lt.s32.totalorder %s16, 2
      %s202 = scalar_select %p201, %s16, 2
      %s203 = smul.addr %s202, 16
      %s204 = smul.addr %s203, 4
      %s205 = scalar_lea.vmem %s2, %s204
      %p206 = scmp.lt.s32.totalorder %s16, 2
      %s207 = scalar_select %p206, %s16, 2
      %s208 = scalar_lea.vmem %s3, %s207
      %p209 = scmp.lt.s32.totalorder %s16, 2
      %s210 = scalar_select %p209, %s16, 2
      %s211 = scalar_lea.vmem %s4, %s210
      %p213 = scmp.eq.s32.totalorder %s16, 0
      // Predicated region
      $region37: #{gcn_forward.1} parent=35 // pred_check
        %p214 = pneg %p213
      $region38: #{gcn_forward.1} parent=35 // pred_check_branch
        %216 = sbr.rel (%p214) target = $region40
      $region39: #{gcn_forward.1} parent=35 // pred_region
        %p218 = scmp.lt.u32.totalorder 4, 8
        %p219 = pneg %p218
        // Predicated region
        $region41: #{gcn_forward.1} parent=39 // pred_check
          _
        $region42: #{gcn_forward.1} parent=39 // pred_check_branch
          %221 = sbr.rel (%p218) target = $region44
        $region43: #{gcn_forward.1} parent=39 // pred_region
          %s362 = sand.u32 4, 7
          %p363 = scmp.eq.s32.totalorder %s362, 0
          %p364 = pneg %p363
          // Predicated region
          $region56: #{gcn_forward.1} parent=43 // pred_check
            _
          $region57: #{gcn_forward.1} parent=43 // pred_check_branch
            %366 = sbr.rel (%p363) target = $region59
          $region58: #{gcn_forward.1} parent=43 // pred_region
            %s367 = sand.u32 4, 7
            %s368 = ssub.s32 4, %s367
            %s369 = scalar_lea.vmem %s0, %s368
            %s370 = ssub.s32 4, %s367
            %s371 = scalar_lea.vmem [#allocation2], %s370
            loop: start=0, step=1, limit=1
            $region60: #{gcn_forward.1} parent=58 // loop_pre_header
              _
            $region61: #{gcn_forward.1} parent=58 // loop_header
              %s373 = sphi 0, %s377
              %p374 = scmp.ge.s32.totalorder %s373, 1
              %s378 = sphi %s0, %s0
              %s379 = sphi [#allocation2], [#allocation2]
            $region62: #{gcn_forward.1} parent=58 // loop_header_branch
              %376 = sbr.rel (%p374) target = $region66
            $region63: #{gcn_forward.1} parent=58 // loop_body
              _
            $region64: #{gcn_forward.1} parent=58 // loop_footer
              %s377 = sadd.s32 1, %s373
            $region65: #{gcn_forward.1} parent=58 // loop_footer_branch
              %372 = sbr.rel target = $region61
            $region66: #{gcn_forward.1} parent=58 // loop_exit
              _
            %s380 = sshllo.u32 0, %s367
            loop: start=0, step=1, limit=1
            $region67: #{gcn_forward.1} parent=58 // loop_pre_header
              _
            $region68: #{gcn_forward.1} parent=58 // loop_header
              %s382 = sphi 0, %s386
              %p383 = scmp.ge.s32.totalorder %s382, 1
              %s387 = sphi %s369, %s369
              %s388 = sphi %s371, %s371
            $region69: #{gcn_forward.1} parent=58 // loop_header_branch
              %385 = sbr.rel (%p383) target = $region73
            $region70: #{gcn_forward.1} parent=58 // loop_body
              %v389 = vld [vmem:[%s387] sm:%s380]
              %390 = vst [vmem:[%s388] sm:%s380] %v389
              %v391 = vld [vmem:[%s387 + $0x8] sm:%s380]
              %392 = vst [vmem:[%s388 + $0x4] sm:%s380] %v391
              %v393 = vld [vmem:[%s387 + $0x4] sm:%s380]
              %394 = vst [vmem:[%s388 + $0x8] sm:%s380] %v393
              %v395 = vld [vmem:[%s387 + $0xc] sm:%s380]
              %396 = vst [vmem:[%s388 + $0xc] sm:%s380] %v395
              %v397 = vld [vmem:[%s387 + $0x10] sm:%s380]
              %398 = vst [vmem:[%s388 + $0x10] sm:%s380] %v397
              %v399 = vld [vmem:[%s387 + $0x18] sm:%s380]
              %400 = vst [vmem:[%s388 + $0x14] sm:%s380] %v399
              %v401 = vld [vmem:[%s387 + $0x14] sm:%s380]
              %402 = vst [vmem:[%s388 + $0x18] sm:%s380] %v401
              %v403 = vld [vmem:[%s387 + $0x1c] sm:%s380]
              %404 = vst [vmem:[%s388 + $0x1c] sm:%s380] %v403
              %v405 = vld [vmem:[%s387 + $0x20] sm:%s380]
              %406 = vst [vmem:[%s388 + $0x20] sm:%s380] %v405
              %v407 = vld [vmem:[%s387 + $0x28] sm:%s380]
              %408 = vst [vmem:[%s388 + $0x24] sm:%s380] %v407
              %v409 = vld [vmem:[%s387 + $0x24] sm:%s380]
              %410 = vst [vmem:[%s388 + $0x28] sm:%s380] %v409
              %v411 = vld [vmem:[%s387 + $0x2c] sm:%s380]
              %412 = vst [vmem:[%s388 + $0x2c] sm:%s380] %v411
              %v413 = vld [vmem:[%s387 + $0x30] sm:%s380]
              %414 = vst [vmem:[%s388 + $0x30] sm:%s380] %v413
              %v415 = vld [vmem:[%s387 + $0x38] sm:%s380]
              %416 = vst [vmem:[%s388 + $0x34] sm:%s380] %v415
              %v417 = vld [vmem:[%s387 + $0x34] sm:%s380]
              %418 = vst [vmem:[%s388 + $0x38] sm:%s380] %v417
              %v419 = vld [vmem:[%s387 + $0x3c] sm:%s380]
              %420 = vst [vmem:[%s388 + $0x3c] sm:%s380] %v419
              %v421 = vld [vmem:[%s387 + $0x40] sm:%s380]
              %422 = vst [vmem:[%s388 + $0x40] sm:%s380] %v421
              %v423 = vld [vmem:[%s387 + $0x48] sm:%s380]
              %424 = vst [vmem:[%s388 + $0x44] sm:%s380] %v423
              %v425 = vld [vmem:[%s387 + $0x44] sm:%s380]
              %426 = vst [vmem:[%s388 + $0x48] sm:%s380] %v425
              %v427 = vld [vmem:[%s387 + $0x4c] sm:%s380]
              %428 = vst [vmem:[%s388 + $0x4c] sm:%s380] %v427
              %v429 = vld [vmem:[%s387 + $0x50] sm:%s380]
              %430 = vst [vmem:[%s388 + $0x50] sm:%s380] %v429
              %v431 = vld [vmem:[%s387 + $0x58] sm:%s380]
              %432 = vst [vmem:[%s388 + $0x54] sm:%s380] %v431
              %v433 = vld [vmem:[%s387 + $0x54] sm:%s380]
              %434 = vst [vmem:[%s388 + $0x58] sm:%s380] %v433
              %v435 = vld [vmem:[%s387 + $0x5c] sm:%s380]
              %436 = vst [vmem:[%s388 + $0x5c] sm:%s380] %v435
              %v437 = vld [vmem:[%s387 + $0x60] sm:%s380]
              %438 = vst [vmem:[%s388 + $0x60] sm:%s380] %v437
              %v439 = vld [vmem:[%s387 + $0x68] sm:%s380]
              %440 = vst [vmem:[%s388 + $0x64] sm:%s380] %v439
              %v441 = vld [vmem:[%s387 + $0x64] sm:%s380]
              %442 = vst [vmem:[%s388 + $0x68] sm:%s380] %v441
              %v443 = vld [vmem:[%s387 + $0x6c] sm:%s380]
              %444 = vst [vmem:[%s388 + $0x6c] sm:%s380] %v443
              %v445 = vld [vmem:[%s387 + $0x70] sm:%s380]
              %446 = vst [vmem:[%s388 + $0x70] sm:%s380] %v445
              %v447 = vld [vmem:[%s387 + $0x78] sm:%s380]
              %448 = vst [vmem:[%s388 + $0x74] sm:%s380] %v447
              %v449 = vld [vmem:[%s387 + $0x74] sm:%s380]
              %450 = vst [vmem:[%s388 + $0x78] sm:%s380] %v449
              %v451 = vld [vmem:[%s387 + $0x7c] sm:%s380]
              %452 = vst [vmem:[%s388 + $0x7c] sm:%s380] %v451
              %v453 = vld [vmem:[%s387 + $0x80] sm:%s380]
              %454 = vst [vmem:[%s388 + $0x80] sm:%s380] %v453
              %v455 = vld [vmem:[%s387 + $0x88] sm:%s380]
              %456 = vst [vmem:[%s388 + $0x84] sm:%s380] %v455
              %v457 = vld [vmem:[%s387 + $0x84] sm:%s380]
              %458 = vst [vmem:[%s388 + $0x88] sm:%s380] %v457
              %v459 = vld [vmem:[%s387 + $0x8c] sm:%s380]
              %460 = vst [vmem:[%s388 + $0x8c] sm:%s380] %v459
              %v461 = vld [vmem:[%s387 + $0x90] sm:%s380]
              %462 = vst [vmem:[%s388 + $0x90] sm:%s380] %v461
              %v463 = vld [vmem:[%s387 + $0x98] sm:%s380]
              %464 = vst [vmem:[%s388 + $0x94] sm:%s380] %v463
              %v465 = vld [vmem:[%s387 + $0x94] sm:%s380]
              %466 = vst [vmem:[%s388 + $0x98] sm:%s380] %v465
              %v467 = vld [vmem:[%s387 + $0x9c] sm:%s380]
              %468 = vst [vmem:[%s388 + $0x9c] sm:%s380] %v467
              %v469 = vld [vmem:[%s387 + $0xa0] sm:%s380]
              %470 = vst [vmem:[%s388 + $0xa0] sm:%s380] %v469
              %v471 = vld [vmem:[%s387 + $0xa8] sm:%s380]
              %472 = vst [vmem:[%s388 + $0xa4] sm:%s380] %v471
              %v473 = vld [vmem:[%s387 + $0xa4] sm:%s380]
              %474 = vst [vmem:[%s388 + $0xa8] sm:%s380] %v473
              %v475 = vld [vmem:[%s387 + $0xac] sm:%s380]
              %476 = vst [vmem:[%s388 + $0xac] sm:%s380] %v475
              %v477 = vld [vmem:[%s387 + $0xb0] sm:%s380]
              %478 = vst [vmem:[%s388 + $0xb0] sm:%s380] %v477
              %v479 = vld [vmem:[%s387 + $0xb8] sm:%s380]
              %480 = vst [vmem:[%s388 + $0xb4] sm:%s380] %v479
              %v481 = vld [vmem:[%s387 + $0xb4] sm:%s380]
              %482 = vst [vmem:[%s388 + $0xb8] sm:%s380] %v481
              %v483 = vld [vmem:[%s387 + $0xbc] sm:%s380]
              %484 = vst [vmem:[%s388 + $0xbc] sm:%s380] %v483
              %v485 = vld [vmem:[%s387 + $0xc0] sm:%s380]
              %486 = vst [vmem:[%s388 + $0xc0] sm:%s380] %v485
              %v487 = vld [vmem:[%s387 + $0xc8] sm:%s380]
              %488 = vst [vmem:[%s388 + $0xc4] sm:%s380] %v487
              %v489 = vld [vmem:[%s387 + $0xc4] sm:%s380]
              %490 = vst [vmem:[%s388 + $0xc8] sm:%s380] %v489
              %v491 = vld [vmem:[%s387 + $0xcc] sm:%s380]
              %492 = vst [vmem:[%s388 + $0xcc] sm:%s380] %v491
              %v493 = vld [vmem:[%s387 + $0xd0] sm:%s380]
              %494 = vst [vmem:[%s388 + $0xd0] sm:%s380] %v493
              %v495 = vld [vmem:[%s387 + $0xd8] sm:%s380]
              %496 = vst [vmem:[%s388 + $0xd4] sm:%s380] %v495
              %v497 = vld [vmem:[%s387 + $0xd4] sm:%s380]
              %498 = vst [vmem:[%s388 + $0xd8] sm:%s380] %v497
              %v499 = vld [vmem:[%s387 + $0xdc] sm:%s380]
              %500 = vst [vmem:[%s388 + $0xdc] sm:%s380] %v499
              %v501 = vld [vmem:[%s387 + $0xe0] sm:%s380]
              %502 = vst [vmem:[%s388 + $0xe0] sm:%s380] %v501
              %v503 = vld [vmem:[%s387 + $0xe8] sm:%s380]
              %504 = vst [vmem:[%s388 + $0xe4] sm:%s380] %v503
              %v505 = vld [vmem:[%s387 + $0xe4] sm:%s380]
              %506 = vst [vmem:[%s388 + $0xe8] sm:%s380] %v505
              %v507 = vld [vmem:[%s387 + $0xec] sm:%s380]
              %508 = vst [vmem:[%s388 + $0xec] sm:%s380] %v507
              %v509 = vld [vmem:[%s387 + $0xf0] sm:%s380]
              %510 = vst [vmem:[%s388 + $0xf0] sm:%s380] %v509
              %v511 = vld [vmem:[%s387 + $0xf8] sm:%s380]
              %512 = vst [vmem:[%s388 + $0xf4] sm:%s380] %v511
              %v513 = vld [vmem:[%s387 + $0xf4] sm:%s380]
              %514 = vst [vmem:[%s388 + $0xf8] sm:%s380] %v513
              %v515 = vld [vmem:[%s387 + $0xfc] sm:%s380]
              %516 = vst [vmem:[%s388 + $0xfc] sm:%s380] %v515
            $region71: #{gcn_forward.1} parent=58 // loop_footer
              %s386 = sadd.s32 1, %s382
            $region72: #{gcn_forward.1} parent=58 // loop_footer_branch
              %381 = sbr.rel target = $region68
            $region73: #{gcn_forward.1} parent=58 // loop_exit
              _
          $region59: #{gcn_forward.1} parent=43 // pred_fallthru
            _
        $region44: #{gcn_forward.1} parent=39 // pred_fallthru
          _
        // Predicated region
        $region45: #{gcn_forward.1} parent=39 // pred_check
          %p222 = pneg %p218
        $region46: #{gcn_forward.1} parent=39 // pred_check_branch
          %224 = sbr.rel (%p222) target = $region48
        $region47: #{gcn_forward.1} parent=39 // pred_region
          %s225 = sshllo.u32 0, 4
          loop: start=0, step=1, limit=1
          $region49: #{gcn_forward.1} parent=47 // loop_pre_header
            _
          $region50: #{gcn_forward.1} parent=47 // loop_header
            %s227 = sphi 0, %s231
            %p228 = scmp.ge.s32.totalorder %s227, 1
            %s232 = sphi %s0, %s0
            %s233 = sphi [#allocation2], [#allocation2]
          $region51: #{gcn_forward.1} parent=47 // loop_header_branch
            %230 = sbr.rel (%p228) target = $region55
          $region52: #{gcn_forward.1} parent=47 // loop_body
            %v234 = vld [vmem:[%s232] sm:%s225]
            %235 = vst [vmem:[%s233] sm:%s225] %v234
            %v236 = vld [vmem:[%s232 + $0x8] sm:%s225]
            %237 = vst [vmem:[%s233 + $0x4] sm:%s225] %v236
            %v238 = vld [vmem:[%s232 + $0x4] sm:%s225]
            %239 = vst [vmem:[%s233 + $0x8] sm:%s225] %v238
            %v240 = vld [vmem:[%s232 + $0xc] sm:%s225]
            %241 = vst [vmem:[%s233 + $0xc] sm:%s225] %v240
            %v242 = vld [vmem:[%s232 + $0x10] sm:%s225]
            %243 = vst [vmem:[%s233 + $0x10] sm:%s225] %v242
            %v244 = vld [vmem:[%s232 + $0x18] sm:%s225]
            %245 = vst [vmem:[%s233 + $0x14] sm:%s225] %v244
            %v246 = vld [vmem:[%s232 + $0x14] sm:%s225]
            %247 = vst [vmem:[%s233 + $0x18] sm:%s225] %v246
            %v248 = vld [vmem:[%s232 + $0x1c] sm:%s225]
            %249 = vst [vmem:[%s233 + $0x1c] sm:%s225] %v248
            %v250 = vld [vmem:[%s232 + $0x20] sm:%s225]
            %251 = vst [vmem:[%s233 + $0x20] sm:%s225] %v250
            %v252 = vld [vmem:[%s232 + $0x28] sm:%s225]
            %253 = vst [vmem:[%s233 + $0x24] sm:%s225] %v252
            %v254 = vld [vmem:[%s232 + $0x24] sm:%s225]
            %255 = vst [vmem:[%s233 + $0x28] sm:%s225] %v254
            %v256 = vld [vmem:[%s232 + $0x2c] sm:%s225]
            %257 = vst [vmem:[%s233 + $0x2c] sm:%s225] %v256
            %v258 = vld [vmem:[%s232 + $0x30] sm:%s225]
            %259 = vst [vmem:[%s233 + $0x30] sm:%s225] %v258
            %v260 = vld [vmem:[%s232 + $0x38] sm:%s225]
            %261 = vst [vmem:[%s233 + $0x34] sm:%s225] %v260
            %v262 = vld [vmem:[%s232 + $0x34] sm:%s225]
            %263 = vst [vmem:[%s233 + $0x38] sm:%s225] %v262
            %v264 = vld [vmem:[%s232 + $0x3c] sm:%s225]
            %265 = vst [vmem:[%s233 + $0x3c] sm:%s225] %v264
            %v266 = vld [vmem:[%s232 + $0x40] sm:%s225]
            %267 = vst [vmem:[%s233 + $0x40] sm:%s225] %v266
            %v268 = vld [vmem:[%s232 + $0x48] sm:%s225]
            %269 = vst [vmem:[%s233 + $0x44] sm:%s225] %v268
            %v270 = vld [vmem:[%s232 + $0x44] sm:%s225]
            %271 = vst [vmem:[%s233 + $0x48] sm:%s225] %v270
            %v272 = vld [vmem:[%s232 + $0x4c] sm:%s225]
            %273 = vst [vmem:[%s233 + $0x4c] sm:%s225] %v272
            %v274 = vld [vmem:[%s232 + $0x50] sm:%s225]
            %275 = vst [vmem:[%s233 + $0x50] sm:%s225] %v274
            %v276 = vld [vmem:[%s232 + $0x58] sm:%s225]
            %277 = vst [vmem:[%s233 + $0x54] sm:%s225] %v276
            %v278 = vld [vmem:[%s232 + $0x54] sm:%s225]
            %279 = vst [vmem:[%s233 + $0x58] sm:%s225] %v278
            %v280 = vld [vmem:[%s232 + $0x5c] sm:%s225]
            %281 = vst [vmem:[%s233 + $0x5c] sm:%s225] %v280
            %v282 = vld [vmem:[%s232 + $0x60] sm:%s225]
            %283 = vst [vmem:[%s233 + $0x60] sm:%s225] %v282
            %v284 = vld [vmem:[%s232 + $0x68] sm:%s225]
            %285 = vst [vmem:[%s233 + $0x64] sm:%s225] %v284
            %v286 = vld [vmem:[%s232 + $0x64] sm:%s225]
            %287 = vst [vmem:[%s233 + $0x68] sm:%s225] %v286
            %v288 = vld [vmem:[%s232 + $0x6c] sm:%s225]
            %289 = vst [vmem:[%s233 + $0x6c] sm:%s225] %v288
            %v290 = vld [vmem:[%s232 + $0x70] sm:%s225]
            %291 = vst [vmem:[%s233 + $0x70] sm:%s225] %v290
            %v292 = vld [vmem:[%s232 + $0x78] sm:%s225]
            %293 = vst [vmem:[%s233 + $0x74] sm:%s225] %v292
            %v294 = vld [vmem:[%s232 + $0x74] sm:%s225]
            %295 = vst [vmem:[%s233 + $0x78] sm:%s225] %v294
            %v296 = vld [vmem:[%s232 + $0x7c] sm:%s225]
            %297 = vst [vmem:[%s233 + $0x7c] sm:%s225] %v296
            %v298 = vld [vmem:[%s232 + $0x80] sm:%s225]
            %299 = vst [vmem:[%s233 + $0x80] sm:%s225] %v298
            %v300 = vld [vmem:[%s232 + $0x88] sm:%s225]
            %301 = vst [vmem:[%s233 + $0x84] sm:%s225] %v300
            %v302 = vld [vmem:[%s232 + $0x84] sm:%s225]
            %303 = vst [vmem:[%s233 + $0x88] sm:%s225] %v302
            %v304 = vld [vmem:[%s232 + $0x8c] sm:%s225]
            %305 = vst [vmem:[%s233 + $0x8c] sm:%s225] %v304
            %v306 = vld [vmem:[%s232 + $0x90] sm:%s225]
            %307 = vst [vmem:[%s233 + $0x90] sm:%s225] %v306
            %v308 = vld [vmem:[%s232 + $0x98] sm:%s225]
            %309 = vst [vmem:[%s233 + $0x94] sm:%s225] %v308
            %v310 = vld [vmem:[%s232 + $0x94] sm:%s225]
            %311 = vst [vmem:[%s233 + $0x98] sm:%s225] %v310
            %v312 = vld [vmem:[%s232 + $0x9c] sm:%s225]
            %313 = vst [vmem:[%s233 + $0x9c] sm:%s225] %v312
            %v314 = vld [vmem:[%s232 + $0xa0] sm:%s225]
            %315 = vst [vmem:[%s233 + $0xa0] sm:%s225] %v314
            %v316 = vld [vmem:[%s232 + $0xa8] sm:%s225]
            %317 = vst [vmem:[%s233 + $0xa4] sm:%s225] %v316
            %v318 = vld [vmem:[%s232 + $0xa4] sm:%s225]
            %319 = vst [vmem:[%s233 + $0xa8] sm:%s225] %v318
            %v320 = vld [vmem:[%s232 + $0xac] sm:%s225]
            %321 = vst [vmem:[%s233 + $0xac] sm:%s225] %v320
            %v322 = vld [vmem:[%s232 + $0xb0] sm:%s225]
            %323 = vst [vmem:[%s233 + $0xb0] sm:%s225] %v322
            %v324 = vld [vmem:[%s232 + $0xb8] sm:%s225]
            %325 = vst [vmem:[%s233 + $0xb4] sm:%s225] %v324
            %v326 = vld [vmem:[%s232 + $0xb4] sm:%s225]
            %327 = vst [vmem:[%s233 + $0xb8] sm:%s225] %v326
            %v328 = vld [vmem:[%s232 + $0xbc] sm:%s225]
            %329 = vst [vmem:[%s233 + $0xbc] sm:%s225] %v328
            %v330 = vld [vmem:[%s232 + $0xc0] sm:%s225]
            %331 = vst [vmem:[%s233 + $0xc0] sm:%s225] %v330
            %v332 = vld [vmem:[%s232 + $0xc8] sm:%s225]
            %333 = vst [vmem:[%s233 + $0xc4] sm:%s225] %v332
            %v334 = vld [vmem:[%s232 + $0xc4] sm:%s225]
            %335 = vst [vmem:[%s233 + $0xc8] sm:%s225] %v334
            %v336 = vld [vmem:[%s232 + $0xcc] sm:%s225]
            %337 = vst [vmem:[%s233 + $0xcc] sm:%s225] %v336
            %v338 = vld [vmem:[%s232 + $0xd0] sm:%s225]
            %339 = vst [vmem:[%s233 + $0xd0] sm:%s225] %v338
            %v340 = vld [vmem:[%s232 + $0xd8] sm:%s225]
            %341 = vst [vmem:[%s233 + $0xd4] sm:%s225] %v340
            %v342 = vld [vmem:[%s232 + $0xd4] sm:%s225]
            %343 = vst [vmem:[%s233 + $0xd8] sm:%s225] %v342
            %v344 = vld [vmem:[%s232 + $0xdc] sm:%s225]
            %345 = vst [vmem:[%s233 + $0xdc] sm:%s225] %v344
            %v346 = vld [vmem:[%s232 + $0xe0] sm:%s225]
            %347 = vst [vmem:[%s233 + $0xe0] sm:%s225] %v346
            %v348 = vld [vmem:[%s232 + $0xe8] sm:%s225]
            %349 = vst [vmem:[%s233 + $0xe4] sm:%s225] %v348
            %v350 = vld [vmem:[%s232 + $0xe4] sm:%s225]
            %351 = vst [vmem:[%s233 + $0xe8] sm:%s225] %v350
            %v352 = vld [vmem:[%s232 + $0xec] sm:%s225]
            %353 = vst [vmem:[%s233 + $0xec] sm:%s225] %v352
            %v354 = vld [vmem:[%s232 + $0xf0] sm:%s225]
            %355 = vst [vmem:[%s233 + $0xf0] sm:%s225] %v354
            %v356 = vld [vmem:[%s232 + $0xf8] sm:%s225]
            %357 = vst [vmem:[%s233 + $0xf4] sm:%s225] %v356
            %v358 = vld [vmem:[%s232 + $0xf4] sm:%s225]
            %359 = vst [vmem:[%s233 + $0xf8] sm:%s225] %v358
            %v360 = vld [vmem:[%s232 + $0xfc] sm:%s225]
            %361 = vst [vmem:[%s233 + $0xfc] sm:%s225] %v360
          $region53: #{gcn_forward.1} parent=47 // loop_footer
            %s231 = sadd.s32 1, %s227
          $region54: #{gcn_forward.1} parent=47 // loop_footer_branch
            %226 = sbr.rel target = $region50
          $region55: #{gcn_forward.1} parent=47 // loop_exit
            _
        $region48: #{gcn_forward.1} parent=39 // pred_fallthru
          _
        // Predicated region
        $region74: #{gcn_forward.1} parent=39 // pred_check
          _
        $region75: #{gcn_forward.1} parent=39 // pred_check_branch
          %519 = sbr.rel (0) target = $region77
        $region76: #{gcn_forward.1} parent=39 // pred_region
          %520 = vsyncadd [#allocation4], 4096
        $region77: #{gcn_forward.1} parent=39 // pred_fallthru
          _
        %v521 = vld [vmem:[%s1] sm:$0xf]
        %v522 = vld [vmem:[%s1 + $0x4] sm:$0xf]
        %v523 = vld [vmem:[%s1 + $0x8] sm:$0xf]
        %v524 = vld [vmem:[%s1 + $0xc] sm:$0xf]
        %v525 = vld [vmem:[%s1 + $0x10] sm:$0xf]
        %v526 = vld [vmem:[%s1 + $0x14] sm:$0xf]
        %v527 = vld [vmem:[%s1 + $0x18] sm:$0xf]
        %v528 = vld [vmem:[%s1 + $0x1c] sm:$0xf]
        %v529 = vld [vmem:[%s1 + $0x20] sm:$0xf]
        %v530 = vld [vmem:[%s1 + $0x24] sm:$0xf]
        %v531 = vld [vmem:[%s1 + $0x28] sm:$0xf]
        %v532 = vld [vmem:[%s1 + $0x2c] sm:$0xf]
        %v533 = vld [vmem:[%s1 + $0x30] sm:$0xf]
        %v534 = vld [vmem:[%s1 + $0x34] sm:$0xf]
        %v535 = vld [vmem:[%s1 + $0x38] sm:$0xf]
        %v536 = vld [vmem:[%s1 + $0x3c] sm:$0xf]
        %v537 = vld [vmem:[%s1 + $0x40] sm:$0xf]
        %v538 = vld [vmem:[%s1 + $0x44] sm:$0xf]
        %v539 = vld [vmem:[%s1 + $0x48] sm:$0xf]
        %v540 = vld [vmem:[%s1 + $0x4c] sm:$0xf]
        %v541 = vld [vmem:[%s1 + $0x50] sm:$0xf]
        %v542 = vld [vmem:[%s1 + $0x54] sm:$0xf]
        %v543 = vld [vmem:[%s1 + $0x58] sm:$0xf]
        %v544 = vld [vmem:[%s1 + $0x5c] sm:$0xf]
        %v545 = vld [vmem:[%s1 + $0x60] sm:$0xf]
        %v546 = vld [vmem:[%s1 + $0x64] sm:$0xf]
        %v547 = vld [vmem:[%s1 + $0x68] sm:$0xf]
        %v548 = vld [vmem:[%s1 + $0x6c] sm:$0xf]
        %v549 = vld [vmem:[%s1 + $0x70] sm:$0xf]
        %v550 = vld [vmem:[%s1 + $0x74] sm:$0xf]
        %v551 = vld [vmem:[%s1 + $0x78] sm:$0xf]
        %v552 = vld [vmem:[%s1 + $0x7c] sm:$0xf]
        %v585 = vunpack.c.l.b16 %v521
        %v586 = vunpack.c.l.b16 %v522
        %v587 = vunpack.c.l.b16 %v523
        %v588 = vunpack.c.l.b16 %v524
        %v589 = vunpack.c.l.b16 %v525
        %v590 = vunpack.c.l.b16 %v526
        %v591 = vunpack.c.l.b16 %v527
        %v592 = vunpack.c.l.b16 %v528
        %v593 = vunpack.c.l.b16 %v529
        %v594 = vunpack.c.l.b16 %v530
        %v595 = vunpack.c.l.b16 %v531
        %v596 = vunpack.c.l.b16 %v532
        %v597 = vunpack.c.l.b16 %v533
        %v598 = vunpack.c.l.b16 %v534
        %v599 = vunpack.c.l.b16 %v535
        %v600 = vunpack.c.l.b16 %v536
        %v601 = vunpack.c.l.b16 %v537
        %v602 = vunpack.c.l.b16 %v538
        %v603 = vunpack.c.l.b16 %v539
        %v604 = vunpack.c.l.b16 %v540
        %v605 = vunpack.c.l.b16 %v541
        %v606 = vunpack.c.l.b16 %v542
        %v607 = vunpack.c.l.b16 %v543
        %v608 = vunpack.c.l.b16 %v544
        %v609 = vunpack.c.l.b16 %v545
        %v610 = vunpack.c.l.b16 %v546
        %v611 = vunpack.c.l.b16 %v547
        %v612 = vunpack.c.l.b16 %v548
        %v613 = vunpack.c.l.b16 %v549
        %v614 = vunpack.c.l.b16 %v550
        %v615 = vunpack.c.l.b16 %v551
        %v616 = vunpack.c.l.b16 %v552
        %v617 = vpack.c.b16 %v586, %v585
        %v618 = vpack.c.b16 %v588, %v587
        %v619 = vpack.c.b16 %v590, %v589
        %v620 = vpack.c.b16 %v592, %v591
        %v621 = vpack.c.b16 %v594, %v593
        %v622 = vpack.c.b16 %v596, %v595
        %v623 = vpack.c.b16 %v598, %v597
        %v624 = vpack.c.b16 %v600, %v599
        %v625 = vpack.c.b16 %v602, %v601
        %v626 = vpack.c.b16 %v604, %v603
        %v627 = vpack.c.b16 %v606, %v605
        %v628 = vpack.c.b16 %v608, %v607
        %v629 = vpack.c.b16 %v610, %v609
        %v630 = vpack.c.b16 %v612, %v611
        %v631 = vpack.c.b16 %v614, %v613
        %v632 = vpack.c.b16 %v616, %v615
        %649 = vst [vmem:[#allocation3] sm:$0xff] %v617
        %650 = vst [vmem:[#allocation3 + $0x8] sm:$0xff] %v618
        %651 = vst [vmem:[#allocation3 + $0x10] sm:$0xff] %v619
        %652 = vst [vmem:[#allocation3 + $0x18] sm:$0xff] %v620
        %653 = vst [vmem:[#allocation3 + $0x20] sm:$0xff] %v621
        %654 = vst [vmem:[#allocation3 + $0x28] sm:$0xff] %v622
        %655 = vst [vmem:[#allocation3 + $0x30] sm:$0xff] %v623
        %656 = vst [vmem:[#allocation3 + $0x38] sm:$0xff] %v624
        %657 = vst [vmem:[#allocation3 + $0x40] sm:$0xff] %v625
        %658 = vst [vmem:[#allocation3 + $0x48] sm:$0xff] %v626
        %659 = vst [vmem:[#allocation3 + $0x50] sm:$0xff] %v627
        %660 = vst [vmem:[#allocation3 + $0x58] sm:$0xff] %v628
        %661 = vst [vmem:[#allocation3 + $0x60] sm:$0xff] %v629
        %662 = vst [vmem:[#allocation3 + $0x68] sm:$0xff] %v630
        %663 = vst [vmem:[#allocation3 + $0x70] sm:$0xff] %v631
        %664 = vst [vmem:[#allocation3 + $0x78] sm:$0xff] %v632
        %s665 = smul.u32 4, 32
        %s666 = smul.u32 %s665, 2
        %s667 = sshll.u32 %s666, 4
        %668 = dma.done [#allocation4], %s667
      $region40: #{gcn_forward.1} parent=35 // pred_fallthru
        _
      %v669 = vld [vmem:[#allocation2] sm:$0xff]
      %v670 = vld [vmem:[#allocation2 + $0x8] sm:$0xff]
      %v671 = vld [vmem:[#allocation2 + $0x10] sm:$0xff]
      %v672 = vld [vmem:[#allocation2 + $0x18] sm:$0xff]
      %v673 = vld [vmem:[#allocation2 + $0x20] sm:$0xff]
      %v674 = vld [vmem:[#allocation2 + $0x28] sm:$0xff]
      %v675 = vld [vmem:[#allocation2 + $0x30] sm:$0xff]
      %v676 = vld [vmem:[#allocation2 + $0x38] sm:$0xff]
      %v677 = vld [vmem:[#allocation2 + $0x40] sm:$0xff]
      %v678 = vld [vmem:[#allocation2 + $0x48] sm:$0xff]
      %v679 = vld [vmem:[#allocation2 + $0x50] sm:$0xff]
      %v680 = vld [vmem:[#allocation2 + $0x58] sm:$0xff]
      %v681 = vld [vmem:[#allocation2 + $0x60] sm:$0xff]
      %v682 = vld [vmem:[#allocation2 + $0x68] sm:$0xff]
      %v683 = vld [vmem:[#allocation2 + $0x70] sm:$0xff]
      %v684 = vld [vmem:[#allocation2 + $0x78] sm:$0xff]
      %v685 = vld [vmem:[#allocation2 + $0x80] sm:$0xff]
      %v686 = vld [vmem:[#allocation2 + $0x88] sm:$0xff]
      %v687 = vld [vmem:[#allocation2 + $0x90] sm:$0xff]
      %v688 = vld [vmem:[#allocation2 + $0x98] sm:$0xff]
      %v689 = vld [vmem:[#allocation2 + $0xa0] sm:$0xff]
      %v690 = vld [vmem:[#allocation2 + $0xa8] sm:$0xff]
      %v691 = vld [vmem:[#allocation2 + $0xb0] sm:$0xff]
      %v692 = vld [vmem:[#allocation2 + $0xb8] sm:$0xff]
      %v693 = vld [vmem:[#allocation2 + $0xc0] sm:$0xff]
      %v694 = vld [vmem:[#allocation2 + $0xc8] sm:$0xff]
      %v695 = vld [vmem:[#allocation2 + $0xd0] sm:$0xff]
      %v696 = vld [vmem:[#allocation2 + $0xd8] sm:$0xff]
      %v697 = vld [vmem:[#allocation2 + $0xe0] sm:$0xff]
      %v698 = vld [vmem:[#allocation2 + $0xe8] sm:$0xff]
      %v699 = vld [vmem:[#allocation2 + $0xf0] sm:$0xff]
      %v700 = vld [vmem:[#allocation2 + $0xf8] sm:$0xff]
      %v701 = vld [vmem:[#allocation3] sm:$0xff]
      %v702 = vld [vmem:[#allocation3 + $0x8] sm:$0xff]
      %v703 = vld [vmem:[#allocation3 + $0x10] sm:$0xff]
      %v704 = vld [vmem:[#allocation3 + $0x18] sm:$0xff]
      %v705 = vld [vmem:[#allocation3 + $0x20] sm:$0xff]
      %v706 = vld [vmem:[#allocation3 + $0x28] sm:$0xff]
      %v707 = vld [vmem:[#allocation3 + $0x30] sm:$0xff]
      %v708 = vld [vmem:[#allocation3 + $0x38] sm:$0xff]
      %v709 = vld [vmem:[#allocation3 + $0x40] sm:$0xff]
      %v710 = vld [vmem:[#allocation3 + $0x48] sm:$0xff]
      %v711 = vld [vmem:[#allocation3 + $0x50] sm:$0xff]
      %v712 = vld [vmem:[#allocation3 + $0x58] sm:$0xff]
      %v713 = vld [vmem:[#allocation3 + $0x60] sm:$0xff]
      %v714 = vld [vmem:[#allocation3 + $0x68] sm:$0xff]
      %v715 = vld [vmem:[#allocation3 + $0x70] sm:$0xff]
      %v716 = vld [vmem:[#allocation3 + $0x78] sm:$0xff]
      %717 = vmatprep.subr.bf16.mxu0 0
      %718 = vmatpush1.bf16.msra.mxu0 %v701
      %719 = vmatprep.subr.bf16.mxu0 0
      %720 = vmatpush1.bf16.msra.mxu0 %v702
      %721 = vmatprep.subr.bf16.mxu0 0
      %722 = vmatpush1.bf16.msra.mxu0 %v703
      %723 = vmatprep.subr.bf16.mxu0 0
      %724 = vmatpush1.bf16.msra.mxu0 %v704
      %725 = vmatprep.subr.bf16.mxu0 0
      %726 = vmatpush1.bf16.msra.mxu0 %v705
      %727 = vmatprep.subr.bf16.mxu0 0
      %728 = vmatpush1.bf16.msra.mxu0 %v706
      %729 = vmatprep.subr.bf16.mxu0 0
      %730 = vmatpush1.bf16.msra.mxu0 %v707
      %731 = vmatprep.subr.bf16.mxu0 0
      %732 = vmatpush1.bf16.msra.mxu0 %v708
      %733 = vmatprep.subr.bf16.mxu0 0
      %734 = vmatpush1.bf16.msra.mxu0 %v709
      %735 = vmatprep.subr.bf16.mxu0 0
      %736 = vmatpush1.bf16.msra.mxu0 %v710
      %737 = vmatprep.subr.bf16.mxu0 0
      %738 = vmatpush1.bf16.msra.mxu0 %v711
      %739 = vmatprep.subr.bf16.mxu0 0
      %740 = vmatpush1.bf16.msra.mxu0 %v712
      %741 = vmatprep.subr.bf16.mxu0 0
      %742 = vmatpush1.bf16.msra.mxu0 %v713
      %743 = vmatprep.subr.bf16.mxu0 0
      %744 = vmatpush1.bf16.msra.mxu0 %v714
      %745 = vmatprep.subr.bf16.mxu0 0
      %746 = vmatpush1.bf16.msra.mxu0 %v715
      %747 = vmatprep.subr.bf16.mxu0 0
      %748 = vmatpush1.bf16.msra.mxu0 %v716
      %749 = vmatprep.mubr.bf16.mxu0 %v670
      %750 = vmatmul.mubr.bf16.gmra.mrb[0].mxu0 %v669
      %v751 = vpop.f32.mrb[0].mxu0
      %v752 = vadd.f32 0.0, %v751
      %v753 = vpop.f32.mrb[0].mxu0
      %v754 = vpop.f32.mrb[0].mxu0
      %v755 = vadd.f32 0.0, %v754
      %v756 = vpop.f32.mrb[0].mxu0
      %757 = vmatprep.mubr.bf16.mxu0 %v672
      %758 = vmatmul.mubr.bf16.gmra.mrb[0].mxu0 %v671
      %v759 = vpop.f32.mrb[0].mxu0
      %v760 = vadd.f32 0.0, %v759
      %v761 = vpop.f32.mrb[0].mxu0
      %v762 = vpop.f32.mrb[0].mxu0
      %v763 = vadd.f32 0.0, %v762
      %v764 = vpop.f32.mrb[0].mxu0
      %765 = vmatprep.mubr.bf16.mxu0 %v674
      %766 = vmatmul.mubr.bf16.gmra.mrb[0].mxu0 %v673
      %v767 = vpop.f32.mrb[0].mxu0
      %v768 = vadd.f32 0.0, %v767
      %v769 = vpop.f32.mrb[0].mxu0
      %v770 = vpop.f32.mrb[0].mxu0
      %v771 = vadd.f32 0.0, %v770
      %v772 = vpop.f32.mrb[0].mxu0
      %773 = vmatprep.mubr.bf16.mxu0 %v676
      %774 = vmatmul.mubr.bf16.gmra.mrb[0].mxu0 %v675
      %v775 = vpop.f32.mrb[0].mxu0
      %v776 = vadd.f32 0.0, %v775
      %v777 = vpop.f32.mrb[0].mxu0
      %v778 = vpop.f32.mrb[0].mxu0
      %v779 = vadd.f32 0.0, %v778
      %v780 = vpop.f32.mrb[0].mxu0
      %781 = vmatprep.mubr.bf16.mxu0 %v678
      %782 = vmatmul.mubr.bf16.gmra.mrb[0].mxu0 %v677
      %v783 = vpop.f32.mrb[0].mxu0
      %v784 = vadd.f32 0.0, %v783
      %v785 = vpop.f32.mrb[0].mxu0
      %v786 = vpop.f32.mrb[0].mxu0
      %v787 = vadd.f32 0.0, %v786
      %v788 = vpop.f32.mrb[0].mxu0
      %789 = vmatprep.mubr.bf16.mxu0 %v680
      %790 = vmatmul.mubr.bf16.gmra.mrb[0].mxu0 %v679
      %v791 = vpop.f32.mrb[0].mxu0
      %v792 = vadd.f32 0.0, %v791
      %v793 = vpop.f32.mrb[0].mxu0
      %v794 = vpop.f32.mrb[0].mxu0
      %v795 = vadd.f32 0.0, %v794
      %v796 = vpop.f32.mrb[0].mxu0
      %797 = vmatprep.mubr.bf16.mxu0 %v682
      %798 = vmatmul.mubr.bf16.gmra.mrb[0].mxu0 %v681
      %v799 = vpop.f32.mrb[0].mxu0
      %v800 = vadd.f32 0.0, %v799
      %v801 = vpop.f32.mrb[0].mxu0
      %v802 = vpop.f32.mrb[0].mxu0
      %v803 = vadd.f32 0.0, %v802
      %v804 = vpop.f32.mrb[0].mxu0
      %805 = vmatprep.mubr.bf16.mxu0 %v684
      %806 = vmatmul.mubr.bf16.gmra.mrb[0].mxu0 %v683
      %v807 = vpop.f32.mrb[0].mxu0
      %v808 = vadd.f32 0.0, %v807
      %v809 = vpop.f32.mrb[0].mxu0
      %v810 = vpop.f32.mrb[0].mxu0
      %v811 = vadd.f32 0.0, %v810
      %v812 = vpop.f32.mrb[0].mxu0
      %813 = vmatprep.mubr.bf16.mxu0 %v686
      %814 = vmatmul.mubr.bf16.gmra.mrb[0].mxu0 %v685
      %v815 = vpop.f32.mrb[0].mxu0
      %v816 = vadd.f32 0.0, %v815
      %v817 = vpop.f32.mrb[0].mxu0
      %v818 = vpop.f32.mrb[0].mxu0
      %v819 = vadd.f32 0.0, %v818
      %v820 = vpop.f32.mrb[0].mxu0
      %821 = vmatprep.mubr.bf16.mxu0 %v688
      %822 = vmatmul.mubr.bf16.gmra.mrb[0].mxu0 %v687
      %v823 = vpop.f32.mrb[0].mxu0
      %v824 = vadd.f32 0.0, %v823
      %v825 = vpop.f32.mrb[0].mxu0
      %v826 = vpop.f32.mrb[0].mxu0
      %v827 = vadd.f32 0.0, %v826
      %v828 = vpop.f32.mrb[0].mxu0
      %829 = vmatprep.mubr.bf16.mxu0 %v690
      %830 = vmatmul.mubr.bf16.gmra.mrb[0].mxu0 %v689
      %v831 = vpop.f32.mrb[0].mxu0
      %v832 = vadd.f32 0.0, %v831
      %v833 = vpop.f32.mrb[0].mxu0
      %v834 = vpop.f32.mrb[0].mxu0
      %v835 = vadd.f32 0.0, %v834
      %v836 = vpop.f32.mrb[0].mxu0
      %837 = vmatprep.mubr.bf16.mxu0 %v692
      %838 = vmatmul.mubr.bf16.gmra.mrb[0].mxu0 %v691
      %v839 = vpop.f32.mrb[0].mxu0
      %v840 = vadd.f32 0.0, %v839
      %v841 = vpop.f32.mrb[0].mxu0
      %v842 = vpop.f32.mrb[0].mxu0
      %v843 = vadd.f32 0.0, %v842
      %v844 = vpop.f32.mrb[0].mxu0
      %845 = vmatprep.mubr.bf16.mxu0 %v694
      %846 = vmatmul.mubr.bf16.gmra.mrb[0].mxu0 %v693
      %v847 = vpop.f32.mrb[0].mxu0
      %v848 = vadd.f32 0.0, %v847
      %v849 = vpop.f32.mrb[0].mxu0
      %v850 = vpop.f32.mrb[0].mxu0
      %v851 = vadd.f32 0.0, %v850
      %v852 = vpop.f32.mrb[0].mxu0
      %853 = vmatprep.mubr.bf16.mxu0 %v696
      %854 = vmatmul.mubr.bf16.gmra.mrb[0].mxu0 %v695
      %v855 = vpop.f32.mrb[0].mxu0
      %v856 = vadd.f32 0.0, %v855
      %v857 = vpop.f32.mrb[0].mxu0
      %v858 = vpop.f32.mrb[0].mxu0
      %v859 = vadd.f32 0.0, %v858
      %v860 = vpop.f32.mrb[0].mxu0
      %861 = vmatprep.mubr.bf16.mxu0 %v698
      %862 = vmatmul.mubr.bf16.gmra.mrb[0].mxu0 %v697
      %v863 = vpop.f32.mrb[0].mxu0
      %v864 = vadd.f32 0.0, %v863
      %v865 = vpop.f32.mrb[0].mxu0
      %v866 = vpop.f32.mrb[0].mxu0
      %v867 = vadd.f32 0.0, %v866
      %v868 = vpop.f32.mrb[0].mxu0
      %869 = vmatprep.mubr.bf16.mxu0 %v700
      %870 = vmatmul.mubr.bf16.gmra.mrb[0].mxu0 %v699
      %v871 = vpop.f32.mrb[0].mxu0
      %v872 = vadd.f32 0.0, %v871
      %v873 = vpop.f32.mrb[0].mxu0
      %v874 = vpop.f32.mrb[0].mxu0
      %v875 = vadd.f32 0.0, %v874
      %v876 = vpop.f32.mrb[0].mxu0
      %877 = vdwg.mxu0
      %v878 = vpack.c.bf16 %v755, %v752
      %v879 = vpack.c.bf16 %v763, %v760
      %v880 = vpack.c.bf16 %v771, %v768
      %v881 = vpack.c.bf16 %v779, %v776
      %v882 = vpack.c.bf16 %v787, %v784
      %v883 = vpack.c.bf16 %v795, %v792
      %v884 = vpack.c.bf16 %v803, %v800
      %v885 = vpack.c.bf16 %v811, %v808
      %v886 = vpack.c.bf16 %v819, %v816
      %v887 = vpack.c.bf16 %v827, %v824
      %v888 = vpack.c.bf16 %v835, %v832
      %v889 = vpack.c.bf16 %v843, %v840
      %v890 = vpack.c.bf16 %v851, %v848
      %v891 = vpack.c.bf16 %v859, %v856
      %v892 = vpack.c.bf16 %v867, %v864
      %v893 = vpack.c.bf16 %v875, %v872
      %v894 = vld [vmem:[%s205] sm:$0xf]
      %v895 = vld [vmem:[%s205 + $0x4] sm:$0xf]
      %v896 = vld [vmem:[%s205 + $0x8] sm:$0xf]
      %v897 = vld [vmem:[%s205 + $0xc] sm:$0xf]
      %v898 = vld [vmem:[%s205 + $0x10] sm:$0xf]
      %v899 = vld [vmem:[%s205 + $0x14] sm:$0xf]
      %v900 = vld [vmem:[%s205 + $0x18] sm:$0xf]
      %v901 = vld [vmem:[%s205 + $0x1c] sm:$0xf]
      %v902 = vld [vmem:[%s205 + $0x20] sm:$0xf]
      %v903 = vld [vmem:[%s205 + $0x24] sm:$0xf]
      %v904 = vld [vmem:[%s205 + $0x28] sm:$0xf]
      %v905 = vld [vmem:[%s205 + $0x2c] sm:$0xf]
      %v906 = vld [vmem:[%s205 + $0x30] sm:$0xf]
      %v907 = vld [vmem:[%s205 + $0x34] sm:$0xf]
      %v908 = vld [vmem:[%s205 + $0x38] sm:$0xf]
      %v909 = vld [vmem:[%s205 + $0x3c] sm:$0xf]
      %v926 = vunpack.c.l.b16 %v894
      %v927 = vunpack.c.l.b16 %v895
      %v928 = vunpack.c.l.b16 %v896
      %v929 = vunpack.c.l.b16 %v897
      %v930 = vunpack.c.l.b16 %v898
      %v931 = vunpack.c.l.b16 %v899
      %v932 = vunpack.c.l.b16 %v900
      %v933 = vunpack.c.l.b16 %v901
      %v934 = vunpack.c.l.b16 %v902
      %v935 = vunpack.c.l.b16 %v903
      %v936 = vunpack.c.l.b16 %v904
      %v937 = vunpack.c.l.b16 %v905
      %v938 = vunpack.c.l.b16 %v906
      %v939 = vunpack.c.l.b16 %v907
      %v940 = vunpack.c.l.b16 %v908
      %v941 = vunpack.c.l.b16 %v909
      %v942 = vpack.c.b16 %v927, %v926
      %v943 = vpack.c.b16 %v929, %v928
      %v944 = vpack.c.b16 %v931, %v930
      %v945 = vpack.c.b16 %v933, %v932
      %v946 = vpack.c.b16 %v935, %v934
      %v947 = vpack.c.b16 %v937, %v936
      %v948 = vpack.c.b16 %v939, %v938
      %v949 = vpack.c.b16 %v941, %v940
      %958 = vmatprep.subr.bf16.mxu0 0
      %959 = vmatpush1.bf16.msra.mxu0 %v942
      %960 = vmatprep.subr.bf16.mxu0 0
      %961 = vmatpush1.bf16.msra.mxu0 %v943
      %962 = vmatprep.subr.bf16.mxu0 0
      %963 = vmatpush1.bf16.msra.mxu0 %v944
      %964 = vmatprep.subr.bf16.mxu0 0
      %965 = vmatpush1.bf16.msra.mxu0 %v945
      %966 = vmatprep.subr.bf16.mxu0 0
      %967 = vmatpush1.bf16.msra.mxu0 %v946
      %968 = vmatprep.subr.bf16.mxu0 0
      %969 = vmatpush1.bf16.msra.mxu0 %v947
      %970 = vmatprep.subr.bf16.mxu0 0
      %971 = vmatpush1.bf16.msra.mxu0 %v948
      %972 = vmatprep.subr.bf16.mxu0 0
      %973 = vmatpush1.bf16.msra.mxu0 %v949
      %974 = vmatprep.subr.bf16.mxu0 0
      %975 = vmatpush1.bf16.msra.mxu0 0
      %976 = vmatprep.subr.bf16.mxu0 0
      %977 = vmatpush1.bf16.msra.mxu0 0
      %978 = vmatprep.subr.bf16.mxu0 0
      %979 = vmatpush1.bf16.msra.mxu0 0
      %980 = vmatprep.subr.bf16.mxu0 0
      %981 = vmatpush1.bf16.msra.mxu0 0
      %982 = vmatprep.subr.bf16.mxu0 0
      %983 = vmatpush1.bf16.msra.mxu0 0
      %984 = vmatprep.subr.bf16.mxu0 0
      %985 = vmatpush1.bf16.msra.mxu0 0
      %986 = vmatprep.subr.bf16.mxu0 0
      %987 = vmatpush1.bf16.msra.mxu0 0
      %988 = vmatprep.subr.bf16.mxu0 0
      %989 = vmatpush1.bf16.msra.mxu0 0
      %990 = vmatprep.mubr.bf16.mxu0 0
      %991 = vmatmul.mubr.bf16.gmra.mrb[0].mxu0 %v878
      %v992 = vpop.f32.mrb[0].mxu0
      %v993 = vadd.f32 0.0, %v992
      %v994 = vpop.f32.mrb[0].mxu0
      %v995 = vpop.f32.mrb[0].mxu0
      %v996 = vadd.f32 0.0, %v995
      %v997 = vpop.f32.mrb[0].mxu0
      %998 = vmatprep.mubr.bf16.mxu0 0
      %999 = vmatmul.mubr.bf16.gmra.mrb[0].mxu0 %v879
      %v1000 = vpop.f32.mrb[0].mxu0
      %v1001 = vadd.f32 0.0, %v1000
      %v1002 = vpop.f32.mrb[0].mxu0
      %v1003 = vpop.f32.mrb[0].mxu0
      %v1004 = vadd.f32 0.0, %v1003
      %v1005 = vpop.f32.mrb[0].mxu0
      %1006 = vmatprep.mubr.bf16.mxu0 0
      %1007 = vmatmul.mubr.bf16.gmra.mrb[0].mxu0 %v880
      %v1008 = vpop.f32.mrb[0].mxu0
      %v1009 = vadd.f32 0.0, %v1008
      %v1010 = vpop.f32.mrb[0].mxu0
      %v1011 = vpop.f32.mrb[0].mxu0
      %v1012 = vadd.f32 0.0, %v1011
      %v1013 = vpop.f32.mrb[0].mxu0
      %1014 = vmatprep.mubr.bf16.mxu0 0
      %1015 = vmatmul.mubr.bf16.gmra.mrb[0].mxu0 %v881
      %v1016 = vpop.f32.mrb[0].mxu0
      %v1017 = vadd.f32 0.0, %v1016
      %v1018 = vpop.f32.mrb[0].mxu0
      %v1019 = vpop.f32.mrb[0].mxu0
      %v1020 = vadd.f32 0.0, %v1019
      %v1021 = vpop.f32.mrb[0].mxu0
      %1022 = vmatprep.mubr.bf16.mxu0 0
      %1023 = vmatmul.mubr.bf16.gmra.mrb[0].mxu0 %v882
      %v1024 = vpop.f32.mrb[0].mxu0
      %v1025 = vadd.f32 0.0, %v1024
      %v1026 = vpop.f32.mrb[0].mxu0
      %v1027 = vpop.f32.mrb[0].mxu0
      %v1028 = vadd.f32 0.0, %v1027
      %v1029 = vpop.f32.mrb[0].mxu0
      %1030 = vmatprep.mubr.bf16.mxu0 0
      %1031 = vmatmul.mubr.bf16.gmra.mrb[0].mxu0 %v883
      %v1032 = vpop.f32.mrb[0].mxu0
      %v1033 = vadd.f32 0.0, %v1032
      %v1034 = vpop.f32.mrb[0].mxu0
      %v1035 = vpop.f32.mrb[0].mxu0
      %v1036 = vadd.f32 0.0, %v1035
      %v1037 = vpop.f32.mrb[0].mxu0
      %1038 = vmatprep.mubr.bf16.mxu0 0
      %1039 = vmatmul.mubr.bf16.gmra.mrb[0].mxu0 %v884
      %v1040 = vpop.f32.mrb[0].mxu0
      %v1041 = vadd.f32 0.0, %v1040
      %v1042 = vpop.f32.mrb[0].mxu0
      %v1043 = vpop.f32.mrb[0].mxu0
      %v1044 = vadd.f32 0.0, %v1043
      %v1045 = vpop.f32.mrb[0].mxu0
      %1046 = vmatprep.mubr.bf16.mxu0 0
      %1047 = vmatmul.mubr.bf16.gmra.mrb[0].mxu0 %v885
      %v1048 = vpop.f32.mrb[0].mxu0
      %v1049 = vadd.f32 0.0, %v1048
      %v1050 = vpop.f32.mrb[0].mxu0
      %v1051 = vpop.f32.mrb[0].mxu0
      %v1052 = vadd.f32 0.0, %v1051
      %v1053 = vpop.f32.mrb[0].mxu0
      %1054 = vmatprep.mubr.bf16.mxu0 0
      %1055 = vmatmul.mubr.bf16.gmra.mrb[0].mxu0 %v886
      %v1056 = vpop.f32.mrb[0].mxu0
      %v1057 = vadd.f32 0.0, %v1056
      %v1058 = vpop.f32.mrb[0].mxu0
      %v1059 = vpop.f32.mrb[0].mxu0
      %v1060 = vadd.f32 0.0, %v1059
      %v1061 = vpop.f32.mrb[0].mxu0
      %1062 = vmatprep.mubr.bf16.mxu0 0
      %1063 = vmatmul.mubr.bf16.gmra.mrb[0].mxu0 %v887
      %v1064 = vpop.f32.mrb[0].mxu0
      %v1065 = vadd.f32 0.0, %v1064
      %v1066 = vpop.f32.mrb[0].mxu0
      %v1067 = vpop.f32.mrb[0].mxu0
      %v1068 = vadd.f32 0.0, %v1067
      %v1069 = vpop.f32.mrb[0].mxu0
      %1070 = vmatprep.mubr.bf16.mxu0 0
      %1071 = vmatmul.mubr.bf16.gmra.mrb[0].mxu0 %v888
      %v1072 = vpop.f32.mrb[0].mxu0
      %v1073 = vadd.f32 0.0, %v1072
      %v1074 = vpop.f32.mrb[0].mxu0
      %v1075 = vpop.f32.mrb[0].mxu0
      %v1076 = vadd.f32 0.0, %v1075
      %v1077 = vpop.f32.mrb[0].mxu0
      %1078 = vmatprep.mubr.bf16.mxu0 0
      %1079 = vmatmul.mubr.bf16.gmra.mrb[0].mxu0 %v889
      %v1080 = vpop.f32.mrb[0].mxu0
      %v1081 = vadd.f32 0.0, %v1080
      %v1082 = vpop.f32.mrb[0].mxu0
      %v1083 = vpop.f32.mrb[0].mxu0
      %v1084 = vadd.f32 0.0, %v1083
      %v1085 = vpop.f32.mrb[0].mxu0
      %1086 = vmatprep.mubr.bf16.mxu0 0
      %1087 = vmatmul.mubr.bf16.gmra.mrb[0].mxu0 %v890
      %v1088 = vpop.f32.mrb[0].mxu0
      %v1089 = vadd.f32 0.0, %v1088
      %v1090 = vpop.f32.mrb[0].mxu0
      %v1091 = vpop.f32.mrb[0].mxu0
      %v1092 = vadd.f32 0.0, %v1091
      %v1093 = vpop.f32.mrb[0].mxu0
      %1094 = vmatprep.mubr.bf16.mxu0 0
      %1095 = vmatmul.mubr.bf16.gmra.mrb[0].mxu0 %v891
      %v1096 = vpop.f32.mrb[0].mxu0
      %v1097 = vadd.f32 0.0, %v1096
      %v1098 = vpop.f32.mrb[0].mxu0
      %v1099 = vpop.f32.mrb[0].mxu0
      %v1100 = vadd.f32 0.0, %v1099
      %v1101 = vpop.f32.mrb[0].mxu0
      %1102 = vmatprep.mubr.bf16.mxu0 0
      %1103 = vmatmul.mubr.bf16.gmra.mrb[0].mxu0 %v892
      %v1104 = vpop.f32.mrb[0].mxu0
      %v1105 = vadd.f32 0.0, %v1104
      %v1106 = vpop.f32.mrb[0].mxu0
      %v1107 = vpop.f32.mrb[0].mxu0
      %v1108 = vadd.f32 0.0, %v1107
      %v1109 = vpop.f32.mrb[0].mxu0
      %1110 = vmatprep.mubr.bf16.mxu0 0
      %1111 = vmatmul.mubr.bf16.gmra.mrb[0].mxu0 %v893
      %v1112 = vpop.f32.mrb[0].mxu0
      %v1113 = vadd.f32 0.0, %v1112
      %v1114 = vpop.f32.mrb[0].mxu0
      %v1115 = vpop.f32.mrb[0].mxu0
      %v1116 = vadd.f32 0.0, %v1115
      %v1117 = vpop.f32.mrb[0].mxu0
      %1118 = vdwg.mxu0
      %v1119 = vld [vmem:[%s208] sm:$0x1]
      %v1121 = vlaneseq
      %v1122 = vshrl.u32 %v1121, 7
      %v1123 = vsub.s32 0, %v1122
      %v1124 = vrot.slane %v1119, %v1123
      %v1126 = vmul.f32 %v993, %v1124
      %v1127 = vmul.f32 %v996, %v1124
      %v1128 = vmul.f32 %v1001, %v1124
      %v1129 = vmul.f32 %v1004, %v1124
      %v1130 = vmul.f32 %v1009, %v1124
      %v1131 = vmul.f32 %v1012, %v1124
      %v1132 = vmul.f32 %v1017, %v1124
      %v1133 = vmul.f32 %v1020, %v1124
      %v1134 = vmul.f32 %v1025, %v1124
      %v1135 = vmul.f32 %v1028, %v1124
      %v1136 = vmul.f32 %v1033, %v1124
      %v1137 = vmul.f32 %v1036, %v1124
      %v1138 = vmul.f32 %v1041, %v1124
      %v1139 = vmul.f32 %v1044, %v1124
      %v1140 = vmul.f32 %v1049, %v1124
      %v1141 = vmul.f32 %v1052, %v1124
      %v1142 = vmul.f32 %v1057, %v1124
      %v1143 = vmul.f32 %v1060, %v1124
      %v1144 = vmul.f32 %v1065, %v1124
      %v1145 = vmul.f32 %v1068, %v1124
      %v1146 = vmul.f32 %v1073, %v1124
      %v1147 = vmul.f32 %v1076, %v1124
      %v1148 = vmul.f32 %v1081, %v1124
      %v1149 = vmul.f32 %v1084, %v1124
      %v1150 = vmul.f32 %v1089, %v1124
      %v1151 = vmul.f32 %v1092, %v1124
      %v1152 = vmul.f32 %v1097, %v1124
      %v1153 = vmul.f32 %v1100, %v1124
      %v1154 = vmul.f32 %v1105, %v1124
      %v1155 = vmul.f32 %v1108, %v1124
      %v1156 = vmul.f32 %v1113, %v1124
      %v1157 = vmul.f32 %v1116, %v1124
      %v1158 = vld [vmem:[%s211] sm:$0x1]
      %v1160 = vlaneseq
      %v1161 = vshrl.u32 %v1160, 7
      %v1162 = vsub.s32 0, %v1161
      %v1163 = vrot.slane %v1158, %v1162
      %v1165 = vadd.f32 %v1126, %v1163
      %v1166 = vadd.f32 %v1127, %v1163
      %v1167 = vadd.f32 %v1128, %v1163
      %v1168 = vadd.f32 %v1129, %v1163
      %v1169 = vadd.f32 %v1130, %v1163
      %v1170 = vadd.f32 %v1131, %v1163
      %v1171 = vadd.f32 %v1132, %v1163
      %v1172 = vadd.f32 %v1133, %v1163
      %v1173 = vadd.f32 %v1134, %v1163
      %v1174 = vadd.f32 %v1135, %v1163
      %v1175 = vadd.f32 %v1136, %v1163
      %v1176 = vadd.f32 %v1137, %v1163
      %v1177 = vadd.f32 %v1138, %v1163
      %v1178 = vadd.f32 %v1139, %v1163
      %v1179 = vadd.f32 %v1140, %v1163
      %v1180 = vadd.f32 %v1141, %v1163
      %v1181 = vadd.f32 %v1142, %v1163
      %v1182 = vadd.f32 %v1143, %v1163
      %v1183 = vadd.f32 %v1144, %v1163
      %v1184 = vadd.f32 %v1145, %v1163
      %v1185 = vadd.f32 %v1146, %v1163
      %v1186 = vadd.f32 %v1147, %v1163
      %v1187 = vadd.f32 %v1148, %v1163
      %v1188 = vadd.f32 %v1149, %v1163
      %v1189 = vadd.f32 %v1150, %v1163
      %v1190 = vadd.f32 %v1151, %v1163
      %v1191 = vadd.f32 %v1152, %v1163
      %v1192 = vadd.f32 %v1153, %v1163
      %v1193 = vadd.f32 %v1154, %v1163
      %v1194 = vadd.f32 %v1155, %v1163
      %v1195 = vadd.f32 %v1156, %v1163
      %v1196 = vadd.f32 %v1157, %v1163
      %p1197 = scmp.lt.s32.totalorder %s16, 2
      // Predicated region
      $region78: #{gcn_forward.1} parent=35 // pred_check
        %p1198 = pneg %p1197
      $region79: #{gcn_forward.1} parent=35 // pred_check_branch
        %1200 = sbr.rel (%p1198) target = $region81
      $region80: #{gcn_forward.1} parent=35 // pred_region
        %v1201 = vmax.f32 %v1165, 0.0
        %v1202 = vmax.f32 %v1166, 0.0
        %v1203 = vmax.f32 %v1167, 0.0
        %v1204 = vmax.f32 %v1168, 0.0
        %v1205 = vmax.f32 %v1169, 0.0
        %v1206 = vmax.f32 %v1170, 0.0
        %v1207 = vmax.f32 %v1171, 0.0
        %v1208 = vmax.f32 %v1172, 0.0
        %v1209 = vmax.f32 %v1173, 0.0
        %v1210 = vmax.f32 %v1174, 0.0
        %v1211 = vmax.f32 %v1175, 0.0
        %v1212 = vmax.f32 %v1176, 0.0
        %v1213 = vmax.f32 %v1177, 0.0
        %v1214 = vmax.f32 %v1178, 0.0
        %v1215 = vmax.f32 %v1179, 0.0
        %v1216 = vmax.f32 %v1180, 0.0
        %v1217 = vmax.f32 %v1181, 0.0
        %v1218 = vmax.f32 %v1182, 0.0
        %v1219 = vmax.f32 %v1183, 0.0
        %v1220 = vmax.f32 %v1184, 0.0
        %v1221 = vmax.f32 %v1185, 0.0
        %v1222 = vmax.f32 %v1186, 0.0
        %v1223 = vmax.f32 %v1187, 0.0
        %v1224 = vmax.f32 %v1188, 0.0
        %v1225 = vmax.f32 %v1189, 0.0
        %v1226 = vmax.f32 %v1190, 0.0
        %v1227 = vmax.f32 %v1191, 0.0
        %v1228 = vmax.f32 %v1192, 0.0
        %v1229 = vmax.f32 %v1193, 0.0
        %v1230 = vmax.f32 %v1194, 0.0
        %v1231 = vmax.f32 %v1195, 0.0
        %v1232 = vmax.f32 %v1196, 0.0
        %v1233 = vpack.c.bf16 %v1202, %v1201
        %v1234 = vpack.c.bf16 %v1204, %v1203
        %v1235 = vpack.c.bf16 %v1206, %v1205
        %v1236 = vpack.c.bf16 %v1208, %v1207
        %v1237 = vpack.c.bf16 %v1210, %v1209
        %v1238 = vpack.c.bf16 %v1212, %v1211
        %v1239 = vpack.c.bf16 %v1214, %v1213
        %v1240 = vpack.c.bf16 %v1216, %v1215
        %v1241 = vpack.c.bf16 %v1218, %v1217
        %v1242 = vpack.c.bf16 %v1220, %v1219
        %v1243 = vpack.c.bf16 %v1222, %v1221
        %v1244 = vpack.c.bf16 %v1224, %v1223
        %v1245 = vpack.c.bf16 %v1226, %v1225
        %v1246 = vpack.c.bf16 %v1228, %v1227
        %v1247 = vpack.c.bf16 %v1230, %v1229
        %v1248 = vpack.c.bf16 %v1232, %v1231
        %1249 = vst [vmem:[#allocation3] sm:$0xff] %v1233
        %1250 = vst [vmem:[#allocation3 + $0x8] sm:$0xff] %v1234
        %1251 = vst [vmem:[#allocation3 + $0x10] sm:$0xff] %v1235
        %1252 = vst [vmem:[#allocation3 + $0x18] sm:$0xff] %v1236
        %1253 = vst [vmem:[#allocation3 + $0x20] sm:$0xff] %v1237
        %1254 = vst [vmem:[#allocation3 + $0x28] sm:$0xff] %v1238
        %1255 = vst [vmem:[#allocation3 + $0x30] sm:$0xff] %v1239
        %1256 = vst [vmem:[#allocation3 + $0x38] sm:$0xff] %v1240
        %1257 = vst [vmem:[#allocation3 + $0x40] sm:$0xff] %v1241
        %1258 = vst [vmem:[#allocation3 + $0x48] sm:$0xff] %v1242
        %1259 = vst [vmem:[#allocation3 + $0x50] sm:$0xff] %v1243
        %1260 = vst [vmem:[#allocation3 + $0x58] sm:$0xff] %v1244
        %1261 = vst [vmem:[#allocation3 + $0x60] sm:$0xff] %v1245
        %1262 = vst [vmem:[#allocation3 + $0x68] sm:$0xff] %v1246
        %1263 = vst [vmem:[#allocation3 + $0x70] sm:$0xff] %v1247
        %1264 = vst [vmem:[#allocation3 + $0x78] sm:$0xff] %v1248
      $region81: #{gcn_forward.1} parent=35 // pred_fallthru
        _
      %p1265 = scmp.eq.s32.totalorder %s16, 2
      // Predicated region
      $region82: #{gcn_forward.1} parent=35 // pred_check
        %p1266 = pneg %p1265
      $region83: #{gcn_forward.1} parent=35 // pred_check_branch
        %1268 = sbr.rel (%p1266) target = $region85
      $region84: #{gcn_forward.1} parent=35 // pred_region
        %1269 = vmax.xlane.f32.xlu0 %v1165
        %v1270 = vpop.xlane.xlu0 %1269
        %1271 = vmax.xlane.f32.xlu0 %v1166
        %v1272 = vpop.xlane.xlu0 %1271
        %1273 = vmax.xlane.f32.xlu0 %v1167
        %v1274 = vpop.xlane.xlu0 %1273
        %1275 = vmax.xlane.f32.xlu0 %v1168
        %v1276 = vpop.xlane.xlu0 %1275
        %1277 = vmax.xlane.f32.xlu0 %v1169
        %v1278 = vpop.xlane.xlu0 %1277
        %1279 = vmax.xlane.f32.xlu0 %v1170
        %v1280 = vpop.xlane.xlu0 %1279
        %1281 = vmax.xlane.f32.xlu0 %v1171
        %v1282 = vpop.xlane.xlu0 %1281
        %1283 = vmax.xlane.f32.xlu0 %v1172
        %v1284 = vpop.xlane.xlu0 %1283
        %1285 = vmax.xlane.f32.xlu0 %v1173
        %v1286 = vpop.xlane.xlu0 %1285
        %1287 = vmax.xlane.f32.xlu0 %v1174
        %v1288 = vpop.xlane.xlu0 %1287
        %1289 = vmax.xlane.f32.xlu0 %v1175
        %v1290 = vpop.xlane.xlu0 %1289
        %1291 = vmax.xlane.f32.xlu0 %v1176
        %v1292 = vpop.xlane.xlu0 %1291
        %1293 = vmax.xlane.f32.xlu0 %v1177
        %v1294 = vpop.xlane.xlu0 %1293
        %1295 = vmax.xlane.f32.xlu0 %v1178
        %v1296 = vpop.xlane.xlu0 %1295
        %1297 = vmax.xlane.f32.xlu0 %v1179
        %v1298 = vpop.xlane.xlu0 %1297
        %1299 = vmax.xlane.f32.xlu0 %v1180
        %v1300 = vpop.xlane.xlu0 %1299
        %1301 = vmax.xlane.f32.xlu0 %v1181
        %v1302 = vpop.xlane.xlu0 %1301
        %1303 = vmax.xlane.f32.xlu0 %v1182
        %v1304 = vpop.xlane.xlu0 %1303
        %1305 = vmax.xlane.f32.xlu0 %v1183
        %v1306 = vpop.xlane.xlu0 %1305
        %1307 = vmax.xlane.f32.xlu0 %v1184
        %v1308 = vpop.xlane.xlu0 %1307
        %1309 = vmax.xlane.f32.xlu0 %v1185
        %v1310 = vpop.xlane.xlu0 %1309
        %1311 = vmax.xlane.f32.xlu0 %v1186
        %v1312 = vpop.xlane.xlu0 %1311
        %1313 = vmax.xlane.f32.xlu0 %v1187
        %v1314 = vpop.xlane.xlu0 %1313
        %1315 = vmax.xlane.f32.xlu0 %v1188
        %v1316 = vpop.xlane.xlu0 %1315
        %1317 = vmax.xlane.f32.xlu0 %v1189
        %v1318 = vpop.xlane.xlu0 %1317
        %1319 = vmax.xlane.f32.xlu0 %v1190
        %v1320 = vpop.xlane.xlu0 %1319
        %1321 = vmax.xlane.f32.xlu0 %v1191
        %v1322 = vpop.xlane.xlu0 %1321
        %1323 = vmax.xlane.f32.xlu0 %v1192
        %v1324 = vpop.xlane.xlu0 %1323
        %1325 = vmax.xlane.f32.xlu0 %v1193
        %v1326 = vpop.xlane.xlu0 %1325
        %1327 = vmax.xlane.f32.xlu0 %v1194
        %v1328 = vpop.xlane.xlu0 %1327
        %1329 = vmax.xlane.f32.xlu0 %v1195
        %v1330 = vpop.xlane.xlu0 %1329
        %1331 = vmax.xlane.f32.xlu0 %v1196
        %v1332 = vpop.xlane.xlu0 %1331
        %v1333 = vsub.f32 %v1165, %v1270
        %v1334 = vsub.f32 %v1166, %v1272
        %v1335 = vsub.f32 %v1167, %v1274
        %v1336 = vsub.f32 %v1168, %v1276
        %v1337 = vsub.f32 %v1169, %v1278
        %v1338 = vsub.f32 %v1170, %v1280
        %v1339 = vsub.f32 %v1171, %v1282
        %v1340 = vsub.f32 %v1172, %v1284
        %v1341 = vsub.f32 %v1173, %v1286
        %v1342 = vsub.f32 %v1174, %v1288
        %v1343 = vsub.f32 %v1175, %v1290
        %v1344 = vsub.f32 %v1176, %v1292
        %v1345 = vsub.f32 %v1177, %v1294
        %v1346 = vsub.f32 %v1178, %v1296
        %v1347 = vsub.f32 %v1179, %v1298
        %v1348 = vsub.f32 %v1180, %v1300
        %v1349 = vsub.f32 %v1181, %v1302
        %v1350 = vsub.f32 %v1182, %v1304
        %v1351 = vsub.f32 %v1183, %v1306
        %v1352 = vsub.f32 %v1184, %v1308
        %v1353 = vsub.f32 %v1185, %v1310
        %v1354 = vsub.f32 %v1186, %v1312
        %v1355 = vsub.f32 %v1187, %v1314
        %v1356 = vsub.f32 %v1188, %v1316
        %v1357 = vsub.f32 %v1189, %v1318
        %v1358 = vsub.f32 %v1190, %v1320
        %v1359 = vsub.f32 %v1191, %v1322
        %v1360 = vsub.f32 %v1192, %v1324
        %v1361 = vsub.f32 %v1193, %v1326
        %v1362 = vsub.f32 %v1194, %v1328
        %v1363 = vsub.f32 %v1195, %v1330
        %v1364 = vsub.f32 %v1196, %v1332
        %v1365 = vmul.f32 %v1333, 1.442695
        %v1366 = vpow.pop %v1365
        %v1367 = vmul.f32 %v1334, 1.442695
        %v1368 = vpow.pop %v1367
        %v1369 = vmul.f32 %v1335, 1.442695
        %v1370 = vpow.pop %v1369
        %v1371 = vmul.f32 %v1336, 1.442695
        %v1372 = vpow.pop %v1371
        %v1373 = vmul.f32 %v1337, 1.442695
        %v1374 = vpow.pop %v1373
        %v1375 = vmul.f32 %v1338, 1.442695
        %v1376 = vpow.pop %v1375
        %v1377 = vmul.f32 %v1339, 1.442695
        %v1378 = vpow.pop %v1377
        %v1379 = vmul.f32 %v1340, 1.442695
        %v1380 = vpow.pop %v1379
        %v1381 = vmul.f32 %v1341, 1.442695
        %v1382 = vpow.pop %v1381
        %v1383 = vmul.f32 %v1342, 1.442695
        %v1384 = vpow.pop %v1383
        %v1385 = vmul.f32 %v1343, 1.442695
        %v1386 = vpow.pop %v1385
        %v1387 = vmul.f32 %v1344, 1.442695
        %v1388 = vpow.pop %v1387
        %v1389 = vmul.f32 %v1345, 1.442695
        %v1390 = vpow.pop %v1389
        %v1391 = vmul.f32 %v1346, 1.442695
        %v1392 = vpow.pop %v1391
        %v1393 = vmul.f32 %v1347, 1.442695
        %v1394 = vpow.pop %v1393
        %v1395 = vmul.f32 %v1348, 1.442695
        %v1396 = vpow.pop %v1395
        %v1397 = vmul.f32 %v1349, 1.442695
        %v1398 = vpow.pop %v1397
        %v1399 = vmul.f32 %v1350, 1.442695
        %v1400 = vpow.pop %v1399
        %v1401 = vmul.f32 %v1351, 1.442695
        %v1402 = vpow.pop %v1401
        %v1403 = vmul.f32 %v1352, 1.442695
        %v1404 = vpow.pop %v1403
        %v1405 = vmul.f32 %v1353, 1.442695
        %v1406 = vpow.pop %v1405
        %v1407 = vmul.f32 %v1354, 1.442695
        %v1408 = vpow.pop %v1407
        %v1409 = vmul.f32 %v1355, 1.442695
        %v1410 = vpow.pop %v1409
        %v1411 = vmul.f32 %v1356, 1.442695
        %v1412 = vpow.pop %v1411
        %v1413 = vmul.f32 %v1357, 1.442695
        %v1414 = vpow.pop %v1413
        %v1415 = vmul.f32 %v1358, 1.442695
        %v1416 = vpow.pop %v1415
        %v1417 = vmul.f32 %v1359, 1.442695
        %v1418 = vpow.pop %v1417
        %v1419 = vmul.f32 %v1360, 1.442695
        %v1420 = vpow.pop %v1419
        %v1421 = vmul.f32 %v1361, 1.442695
        %v1422 = vpow.pop %v1421
        %v1423 = vmul.f32 %v1362, 1.442695
        %v1424 = vpow.pop %v1423
        %v1425 = vmul.f32 %v1363, 1.442695
        %v1426 = vpow.pop %v1425
        %v1427 = vmul.f32 %v1364, 1.442695
        %v1428 = vpow.pop %v1427
        %1429 = vadd.xlane.f32.xlu0 %v1366
        %v1430 = vpop.xlane.xlu0 %1429
        %1431 = vadd.xlane.f32.xlu0 %v1368
        %v1432 = vpop.xlane.xlu0 %1431
        %1433 = vadd.xlane.f32.xlu0 %v1370
        %v1434 = vpop.xlane.xlu0 %1433
        %1435 = vadd.xlane.f32.xlu0 %v1372
        %v1436 = vpop.xlane.xlu0 %1435
        %1437 = vadd.xlane.f32.xlu0 %v1374
        %v1438 = vpop.xlane.xlu0 %1437
        %1439 = vadd.xlane.f32.xlu0 %v1376
        %v1440 = vpop.xlane.xlu0 %1439
        %1441 = vadd.xlane.f32.xlu0 %v1378
        %v1442 = vpop.xlane.xlu0 %1441
        %1443 = vadd.xlane.f32.xlu0 %v1380
        %v1444 = vpop.xlane.xlu0 %1443
        %1445 = vadd.xlane.f32.xlu0 %v1382
        %v1446 = vpop.xlane.xlu0 %1445
        %1447 = vadd.xlane.f32.xlu0 %v1384
        %v1448 = vpop.xlane.xlu0 %1447
        %1449 = vadd.xlane.f32.xlu0 %v1386
        %v1450 = vpop.xlane.xlu0 %1449
        %1451 = vadd.xlane.f32.xlu0 %v1388
        %v1452 = vpop.xlane.xlu0 %1451
        %1453 = vadd.xlane.f32.xlu0 %v1390
        %v1454 = vpop.xlane.xlu0 %1453
        %1455 = vadd.xlane.f32.xlu0 %v1392
        %v1456 = vpop.xlane.xlu0 %1455
        %1457 = vadd.xlane.f32.xlu0 %v1394
        %v1458 = vpop.xlane.xlu0 %1457
        %1459 = vadd.xlane.f32.xlu0 %v1396
        %v1460 = vpop.xlane.xlu0 %1459
        %1461 = vadd.xlane.f32.xlu0 %v1398
        %v1462 = vpop.xlane.xlu0 %1461
        %1463 = vadd.xlane.f32.xlu0 %v1400
        %v1464 = vpop.xlane.xlu0 %1463
        %1465 = vadd.xlane.f32.xlu0 %v1402
        %v1466 = vpop.xlane.xlu0 %1465
        %1467 = vadd.xlane.f32.xlu0 %v1404
        %v1468 = vpop.xlane.xlu0 %1467
        %1469 = vadd.xlane.f32.xlu0 %v1406
        %v1470 = vpop.xlane.xlu0 %1469
        %1471 = vadd.xlane.f32.xlu0 %v1408
        %v1472 = vpop.xlane.xlu0 %1471
        %1473 = vadd.xlane.f32.xlu0 %v1410
        %v1474 = vpop.xlane.xlu0 %1473
        %1475 = vadd.xlane.f32.xlu0 %v1412
        %v1476 = vpop.xlane.xlu0 %1475
        %1477 = vadd.xlane.f32.xlu0 %v1414
        %v1478 = vpop.xlane.xlu0 %1477
        %1479 = vadd.xlane.f32.xlu0 %v1416
        %v1480 = vpop.xlane.xlu0 %1479
        %1481 = vadd.xlane.f32.xlu0 %v1418
        %v1482 = vpop.xlane.xlu0 %1481
        %1483 = vadd.xlane.f32.xlu0 %v1420
        %v1484 = vpop.xlane.xlu0 %1483
        %1485 = vadd.xlane.f32.xlu0 %v1422
        %v1486 = vpop.xlane.xlu0 %1485
        %1487 = vadd.xlane.f32.xlu0 %v1424
        %v1488 = vpop.xlane.xlu0 %1487
        %1489 = vadd.xlane.f32.xlu0 %v1426
        %v1490 = vpop.xlane.xlu0 %1489
        %1491 = vadd.xlane.f32.xlu0 %v1428
        %v1492 = vpop.xlane.xlu0 %1491
        %v1493 = vlog2.pop %v1430
        %v1494 = vmul.f32 %v1493, 0.6931472
        %v1495 = vlog2.pop %v1432
        %v1496 = vmul.f32 %v1495, 0.6931472
        %v1497 = vlog2.pop %v1434
        %v1498 = vmul.f32 %v1497, 0.6931472
        %v1499 = vlog2.pop %v1436
        %v1500 = vmul.f32 %v1499, 0.6931472
        %v1501 = vlog2.pop %v1438
        %v1502 = vmul.f32 %v1501, 0.6931472
        %v1503 = vlog2.pop %v1440
        %v1504 = vmul.f32 %v1503, 0.6931472
        %v1505 = vlog2.pop %v1442
        %v1506 = vmul.f32 %v1505, 0.6931472
        %v1507 = vlog2.pop %v1444
        %v1508 = vmul.f32 %v1507, 0.6931472
        %v1509 = vlog2.pop %v1446
        %v1510 = vmul.f32 %v1509, 0.6931472
        %v1511 = vlog2.pop %v1448
        %v1512 = vmul.f32 %v1511, 0.6931472
        %v1513 = vlog2.pop %v1450
        %v1514 = vmul.f32 %v1513, 0.6931472
        %v1515 = vlog2.pop %v1452
        %v1516 = vmul.f32 %v1515, 0.6931472
        %v1517 = vlog2.pop %v1454
        %v1518 = vmul.f32 %v1517, 0.6931472
        %v1519 = vlog2.pop %v1456
        %v1520 = vmul.f32 %v1519, 0.6931472
        %v1521 = vlog2.pop %v1458
        %v1522 = vmul.f32 %v1521, 0.6931472
        %v1523 = vlog2.pop %v1460
        %v1524 = vmul.f32 %v1523, 0.6931472
        %v1525 = vlog2.pop %v1462
        %v1526 = vmul.f32 %v1525, 0.6931472
        %v1527 = vlog2.pop %v1464
        %v1528 = vmul.f32 %v1527, 0.6931472
        %v1529 = vlog2.pop %v1466
        %v1530 = vmul.f32 %v1529, 0.6931472
        %v1531 = vlog2.pop %v1468
        %v1532 = vmul.f32 %v1531, 0.6931472
        %v1533 = vlog2.pop %v1470
        %v1534 = vmul.f32 %v1533, 0.6931472
        %v1535 = vlog2.pop %v1472
        %v1536 = vmul.f32 %v1535, 0.6931472
        %v1537 = vlog2.pop %v1474
        %v1538 = vmul.f32 %v1537, 0.6931472
        %v1539 = vlog2.pop %v1476
        %v1540 = vmul.f32 %v1539, 0.6931472
        %v1541 = vlog2.pop %v1478
        %v1542 = vmul.f32 %v1541, 0.6931472
        %v1543 = vlog2.pop %v1480
        %v1544 = vmul.f32 %v1543, 0.6931472
        %v1545 = vlog2.pop %v1482
        %v1546 = vmul.f32 %v1545, 0.6931472
        %v1547 = vlog2.pop %v1484
        %v1548 = vmul.f32 %v1547, 0.6931472
        %v1549 = vlog2.pop %v1486
        %v1550 = vmul.f32 %v1549, 0.6931472
        %v1551 = vlog2.pop %v1488
        %v1552 = vmul.f32 %v1551, 0.6931472
        %v1553 = vlog2.pop %v1490
        %v1554 = vmul.f32 %v1553, 0.6931472
        %v1555 = vlog2.pop %v1492
        %v1556 = vmul.f32 %v1555, 0.6931472
        %v1557 = vsub.f32 %v1333, %v1494
        %v1558 = vsub.f32 %v1334, %v1496
        %v1559 = vsub.f32 %v1335, %v1498
        %v1560 = vsub.f32 %v1336, %v1500
        %v1561 = vsub.f32 %v1337, %v1502
        %v1562 = vsub.f32 %v1338, %v1504
        %v1563 = vsub.f32 %v1339, %v1506
        %v1564 = vsub.f32 %v1340, %v1508
        %v1565 = vsub.f32 %v1341, %v1510
        %v1566 = vsub.f32 %v1342, %v1512
        %v1567 = vsub.f32 %v1343, %v1514
        %v1568 = vsub.f32 %v1344, %v1516
        %v1569 = vsub.f32 %v1345, %v1518
        %v1570 = vsub.f32 %v1346, %v1520
        %v1571 = vsub.f32 %v1347, %v1522
        %v1572 = vsub.f32 %v1348, %v1524
        %v1573 = vsub.f32 %v1349, %v1526
        %v1574 = vsub.f32 %v1350, %v1528
        %v1575 = vsub.f32 %v1351, %v1530
        %v1576 = vsub.f32 %v1352, %v1532
        %v1577 = vsub.f32 %v1353, %v1534
        %v1578 = vsub.f32 %v1354, %v1536
        %v1579 = vsub.f32 %v1355, %v1538
        %v1580 = vsub.f32 %v1356, %v1540
        %v1581 = vsub.f32 %v1357, %v1542
        %v1582 = vsub.f32 %v1358, %v1544
        %v1583 = vsub.f32 %v1359, %v1546
        %v1584 = vsub.f32 %v1360, %v1548
        %v1585 = vsub.f32 %v1361, %v1550
        %v1586 = vsub.f32 %v1362, %v1552
        %v1587 = vsub.f32 %v1363, %v1554
        %v1588 = vsub.f32 %v1364, %v1556
        %1589 = vst [vmem:[%s5] sm:$0xff] %v1557
        %1590 = vst [vmem:[%s5 + $0x8] sm:$0xff] %v1558
        %1591 = vst [vmem:[%s5 + $0x10] sm:$0xff] %v1559
        %1592 = vst [vmem:[%s5 + $0x18] sm:$0xff] %v1560
        %1593 = vst [vmem:[%s5 + $0x20] sm:$0xff] %v1561
        %1594 = vst [vmem:[%s5 + $0x28] sm:$0xff] %v1562
        %1595 = vst [vmem:[%s5 + $0x30] sm:$0xff] %v1563
        %1596 = vst [vmem:[%s5 + $0x38] sm:$0xff] %v1564
        %1597 = vst [vmem:[%s5 + $0x40] sm:$0xff] %v1565
        %1598 = vst [vmem:[%s5 + $0x48] sm:$0xff] %v1566
        %1599 = vst [vmem:[%s5 + $0x50] sm:$0xff] %v1567
        %1600 = vst [vmem:[%s5 + $0x58] sm:$0xff] %v1568
        %1601 = vst [vmem:[%s5 + $0x60] sm:$0xff] %v1569
        %1602 = vst [vmem:[%s5 + $0x68] sm:$0xff] %v1570
        %1603 = vst [vmem:[%s5 + $0x70] sm:$0xff] %v1571
        %1604 = vst [vmem:[%s5 + $0x78] sm:$0xff] %v1572
        %1605 = vst [vmem:[%s5 + $0x80] sm:$0xff] %v1573
        %1606 = vst [vmem:[%s5 + $0x88] sm:$0xff] %v1574
        %1607 = vst [vmem:[%s5 + $0x90] sm:$0xff] %v1575
        %1608 = vst [vmem:[%s5 + $0x98] sm:$0xff] %v1576
        %1609 = vst [vmem:[%s5 + $0xa0] sm:$0xff] %v1577
        %1610 = vst [vmem:[%s5 + $0xa8] sm:$0xff] %v1578
        %1611 = vst [vmem:[%s5 + $0xb0] sm:$0xff] %v1579
        %1612 = vst [vmem:[%s5 + $0xb8] sm:$0xff] %v1580
        %1613 = vst [vmem:[%s5 + $0xc0] sm:$0xff] %v1581
        %1614 = vst [vmem:[%s5 + $0xc8] sm:$0xff] %v1582
        %1615 = vst [vmem:[%s5 + $0xd0] sm:$0xff] %v1583
        %1616 = vst [vmem:[%s5 + $0xd8] sm:$0xff] %v1584
        %1617 = vst [vmem:[%s5 + $0xe0] sm:$0xff] %v1585
        %1618 = vst [vmem:[%s5 + $0xe8] sm:$0xff] %v1586
        %1619 = vst [vmem:[%s5 + $0xf0] sm:$0xff] %v1587
        %1620 = vst [vmem:[%s5 + $0xf8] sm:$0xff] %v1588
      $region85: #{gcn_forward.1} parent=35 // pred_fallthru
        _
      // Predicated region
      $region86: #{gcn_forward.1} parent=35 // pred_check
        %p1621 = pneg %p128
      $region87: #{gcn_forward.1} parent=35 // pred_check_branch
        %1623 = sbr.rel (%p1621) target = $region89
      $region88: #{gcn_forward.1} parent=35 // pred_region
        _
      $region89: #{gcn_forward.1} parent=35 // pred_fallthru
        _
      // Predicated region
      $region90: #{gcn_forward.1} parent=35 // pred_check
        %p1624 = pneg %p128
      $region91: #{gcn_forward.1} parent=35 // pred_check_branch
        %1626 = sbr.rel (%p1624) target = $region93
      $region92: #{gcn_forward.1} parent=35 // pred_region
        _
      $region93: #{gcn_forward.1} parent=35 // pred_fallthru
        _
    $region36: #{gcn_forward.1} parent=5 // pred_fallthru
      _
    %p1627 = scmp.le.s32.totalorder 2, %s11
    // Predicated region
    $region94: #{gcn_forward.1} parent=5 // pred_check
      %p1628 = pneg %p1627
    $region95: #{gcn_forward.1} parent=5 // pred_check_branch
      %1630 = sbr.rel (%p1628) target = $region97
    $region96: #{gcn_forward.1} parent=5 // pred_region
      %s1631 = ssub.s32 %s11, 2
    $region97: #{gcn_forward.1} parent=5 // pred_fallthru
      _
  $region6: #{gcn_forward.1} parent=0 // loop_footer
    %s15 = sadd.s32 1, %s11
  $region7: #{gcn_forward.1} parent=0 // loop_footer_branch
    %10 = sbr.rel target = $region3
  $region8: #{gcn_forward.1} parent=0 // loop_exit
    _
  %1632 = vsyncmov [#allocation4]
  %s1633 = vpop.sfrf %1632
  %p1634 = scmp.eq.s32.totalorder %s1633, 0
  %p1635 = pneg %p1634
  %1637 = shalt.err (%p1635)

</llo_original>
